<compile_context>
chip_gen: v7x
topology: tpu7x:2x2x1
jax: 0.10.0
libtpu: 0.0.40
codegen_flags: <defaults>
</compile_context>

<pallas_src>
import functools
import math

import jax
import jax.numpy as jnp
from jax.experimental import pallas as pl
from jax.experimental.pallas import tpu as pltpu


def diff_attn_kernel(lambda_ref, xq_ref, xf_ref, wq_ref, wkv_ref, wout_ref,
                     gamma_ref, o_ref, *, num_heads, dim_head, scaling,
                     lambda_init, eps):
    """Processes one (batch, query-block) tile per grid step, all heads batched."""
    lam = lambda_ref[0]                       # scalar lambda_full (SMEM)
    xq = xq_ref[0]                            # (TQ, in_dim)  bf16
    xf = xf_ref[0]                            # (T,  in_dim)  bf16
    H, dh = num_heads, dim_head
    embed = 2 * H * dh
    TQ = xq.shape[0]
    T = xf.shape[0]

    # --- Projections: bf16 MXU operands, f32 accumulation --------------------
    q = jnp.dot(xq, wq_ref[...], preferred_element_type=jnp.float32)     # (TQ, embed)
    kv = jnp.dot(xf, wkv_ref[...], preferred_element_type=jnp.float32)   # (T, 2*embed)
    k = kv[:, :embed]                                                    # lane-aligned slice
    v = kv[:, embed:]
    q = q * scaling

    # --- Head-batched layout: one batched matmul per stage -------------------
    qh = jnp.transpose(q.reshape(TQ, 2 * H, dh), (1, 0, 2)).astype(jnp.bfloat16)  # (2H,TQ,dh)
    kh = jnp.transpose(k.reshape(T, 2 * H, dh), (1, 0, 2)).astype(jnp.bfloat16)   # (2H,T,dh)
    vh = jnp.transpose(v.reshape(T, H, 2 * dh), (1, 0, 2)).astype(jnp.bfloat16)   # (H,T,2dh)

    # Scores + softmax (f32 elementwise math on all generations).
    s = jnp.einsum('hqd,hkd->hqk', qh, kh,
                   preferred_element_type=jnp.float32)                   # (2H,TQ,T)
    a = jax.nn.softmax(s, axis=-1)
    a = a.reshape(H, 2, TQ, T)
    aw = a[:, 0] - lam * a[:, 1]                                         # (H,TQ,T)

    attn = jnp.einsum('hqk,hkd->hqd', aw.astype(jnp.bfloat16), vh,
                      preferred_element_type=jnp.float32)                # (H,TQ,2dh)

    # --- RMSNorm over the 2*dim_head axis: gamma * x / (sqrt(mean(x^2)) + eps),
    #     fused with the (1 - lambda_init) scale ------------------------------
    rms = jnp.sqrt(jnp.mean(attn * attn, axis=-1, keepdims=True))
    inv = pl.reciprocal(rms + eps, approx=True)                          # (H,TQ,1)
    scale = gamma_ref[...] * (1.0 - lambda_init)                         # (1, 2dh)
    attn_n = attn * inv * scale[None, :, :]                              # (H,TQ,2dh)

    # --- Merge heads into a lane-dense (TQ, embed) slab, single out matmul ---
    attn_2d = jnp.transpose(attn_n, (1, 0, 2)).reshape(TQ, embed)
    o_ref[0] = jnp.dot(attn_2d.astype(jnp.bfloat16), wout_ref[...],
                       preferred_element_type=jnp.float32)               # (TQ, out_dim)


def diff_attn_pallas(x, wq, wkv, wout, gamma, lambda_full, *, num_heads,
                     dim_head, lambda_init, eps=1e-8, tq=None):
    B, T, in_dim = x.shape
    out_dim = wout.shape[1]
    embed = 2 * num_heads * dim_head
    scaling = dim_head ** (-0.5)

    if tq is None:
        tq = T if T <= 256 else 256
    assert T % tq == 0, "TODO(synk): pad ragged sequence lengths"
    num_qb = T // tq

    # bf16 operands for the MXU (halves HBM/VMEM traffic); accumulation stays f32.
    xb = x.astype(jnp.bfloat16)
    wqb = wq.astype(jnp.bfloat16)
    wkvb = wkv.astype(jnp.bfloat16)
    woutb = wout.astype(jnp.bfloat16)

    kernel = functools.partial(
        diff_attn_kernel,
        num_heads=num_heads, dim_head=dim_head, scaling=scaling,
        lambda_init=lambda_init, eps=eps)

    return pl.pallas_call(
        kernel,
        out_shape=jax.ShapeDtypeStruct((B, T, out_dim), jnp.float32),
        grid=(B, num_qb),
        in_specs=[
            pl.BlockSpec(memory_space=pltpu.SMEM),                       # lambda_full (1,)
            pl.BlockSpec((1, tq, in_dim), lambda b, qb: (b, qb, 0)),     # x (query rows)
            pl.BlockSpec((1, T, in_dim), lambda b, qb: (b, 0, 0)),       # x (full, for K/V)
            pl.BlockSpec((in_dim, embed), lambda b, qb: (0, 0)),         # Wq
            pl.BlockSpec((in_dim, 2 * embed), lambda b, qb: (0, 0)),     # Wkv
            pl.BlockSpec((embed, out_dim), lambda b, qb: (0, 0)),        # Wout
            pl.BlockSpec((1, 2 * dim_head), lambda b, qb: (0, 0)),       # gamma
        ],
        out_specs=pl.BlockSpec((1, tq, out_dim), lambda b, qb: (b, qb, 0)),
        compiler_params=pltpu.CompilerParams(
            dimension_semantics=("parallel", "parallel")),
    )(lambda_full, xb, xb, wqb, wkvb, woutb, gamma.reshape(1, -1))


def diff_attn_reference(x, wq, wkv, wout, gamma, lq1, lk1, lq2, lk2, *,
                        num_heads, dim_head, lambda_init, eps=1e-8):
    """Pure-JAX f32 reference mirroring the PyTorch semantics."""
    B, T, _ = x.shape
    embed = 2 * num_heads * dim_head
    scaling = dim_head ** (-0.5)
    q = x @ wq
    kv = x @ wkv
    k, v = kv[..., :embed], kv[..., embed:]
    q = q.reshape(B, T, 2 * num_heads, dim_head).transpose(0, 2, 1, 3) * scaling
    k = k.reshape(B, T, 2 * num_heads, dim_head).transpose(0, 2, 1, 3)
    v = v.reshape(B, T, num_heads, 2 * dim_head).transpose(0, 2, 1, 3)
    dots = jnp.einsum('bhtd,bhsd->bhts', q, k)
    aw = jax.nn.softmax(dots.astype(jnp.float32), axis=-1)
    lam1 = jnp.exp(jnp.sum(lq1 * lk1))
    lam2 = jnp.exp(jnp.sum(lq2 * lk2))
    lam = lam1 - lam2 + lambda_init
    aw = aw.reshape(B, num_heads, 2, T, T)
    aw = aw[:, :, 0] - lam * aw[:, :, 1]
    attn = jnp.einsum('bhts,bhsd->bhtd', aw, v)
    rms = jnp.sqrt(jnp.mean(attn ** 2, axis=-1, keepdims=True))
    attn = gamma * (attn / (rms + eps))
    attn = attn * (1.0 - lambda_init)
    attn = attn.transpose(0, 2, 1, 3).reshape(B, T, embed)
    return attn @ wout


if __name__ == "__main__":
    # Module hyperparameters.
    num_heads, dim_head, depth = 4, 16, 1
    in_dim, out_dim = 32, 32
    B, T = 2, 8
    embed = 2 * num_heads * dim_head                 # 128
    lambda_init = 0.8 - 0.6 * math.exp(-0.3 * depth)

    key = jax.random.PRNGKey(0)
    ks = jax.random.split(key, 8)
    x = jax.random.normal(ks[0], (B, T, in_dim), jnp.float32)
    wq = jax.random.normal(ks[1], (in_dim, embed), jnp.float32) * 0.05
    wkv = jax.random.normal(ks[2], (in_dim, 2 * embed), jnp.float32) * 0.05
    wout = jax.random.normal(ks[3], (embed, out_dim), jnp.float32) * 0.05
    lq1 = 0.1 * jax.random.normal(ks[4], (dim_head,), jnp.float32)
    lk1 = 0.1 * jax.random.normal(ks[5], (dim_head,), jnp.float32)
    lq2 = 0.1 * jax.random.normal(ks[6], (dim_head,), jnp.float32)
    lk2 = 0.1 * jax.random.normal(ks[7], (dim_head,), jnp.float32)
    gamma = jnp.ones((2 * dim_head,), jnp.float32)   # RMSNorm gamma

    # lambda_full is a cheap parameter-only scalar — computed in plain JAX glue.
    lam1 = jnp.exp(jnp.sum(lq1 * lk1))
    lam2 = jnp.exp(jnp.sum(lq2 * lk2))
    lambda_full = (lam1 - lam2 + lambda_init).reshape(1)

    out = diff_attn_pallas(x, wq, wkv, wout, gamma, lambda_full,
                           num_heads=num_heads, dim_head=dim_head,
                           lambda_init=lambda_init)
    out = jax.block_until_ready(out)

    ref = diff_attn_reference(x, wq, wkv, wout, gamma, lq1, lk1, lq2, lk2,
                              num_heads=num_heads, dim_head=dim_head,
                              lambda_init=lambda_init)
    assert out.shape == (B, T, out_dim)
    # bf16 MXU operands + approx reciprocal → compare against f32 reference
    # with a tolerance appropriate for bf16 matmul inputs.
    assert jnp.allclose(out, ref, atol=3e-2, rtol=3e-2), (
        float(jnp.max(jnp.abs(out - ref))))
    print("KERNEL_OK")
</pallas_src>

<mosaic_0001>
module attributes {stable_mosaic.version = 11 : i64} {
  func.func @diff_attn_kernel(%arg0: i32, %arg1: i32, %arg2: memref<1xf32, #tpu.memory_space<smem>>, %arg3: memref<1x8x32xbf16, #tpu.memory_space<vmem>>, %arg4: memref<1x8x32xbf16, #tpu.memory_space<vmem>>, %arg5: memref<32x128xbf16, #tpu.memory_space<vmem>>, %arg6: memref<32x256xbf16, #tpu.memory_space<vmem>>, %arg7: memref<128x32xbf16, #tpu.memory_space<vmem>>, %arg8: memref<1x32xf32, #tpu.memory_space<vmem>>, %arg9: memref<1x8x32xf32, #tpu.memory_space<vmem>>) attributes {dimension_semantics = [#tpu.dimension_semantics<parallel>, #tpu.dimension_semantics<parallel>], iteration_bounds = array<i64: 2, 1>, scalar_prefetch = 0 : i64, scratch_operands = 0 : i64, tpu.core_type = #tpu.core_type<tc>, window_params = [{transform_indices = @transform_0, window_bounds = array<i64: 1>}, {transform_indices = @transform_1, window_bounds = array<i64: 1, 8, 32>}, {transform_indices = @transform_2, window_bounds = array<i64: 1, 8, 32>}, {pipeline_mode = #tpu.pipeline_mode<synchronous>, transform_indices = @transform_3, window_bounds = array<i64: 32, 128>}, {pipeline_mode = #tpu.pipeline_mode<synchronous>, transform_indices = @transform_4, window_bounds = array<i64: 32, 256>}, {pipeline_mode = #tpu.pipeline_mode<synchronous>, transform_indices = @transform_5, window_bounds = array<i64: 128, 32>}, {pipeline_mode = #tpu.pipeline_mode<synchronous>, transform_indices = @transform_6, window_bounds = array<i64: 1, 32>}, {transform_indices = @transform_7, window_bounds = array<i64: 1, 8, 32>}]} {
    %c0 = arith.constant 0 : index
    %0 = memref.load %arg2[%c0] : memref<1xf32, #tpu.memory_space<smem>>
    %c0_0 = arith.constant 0 : index
    %c0_1 = arith.constant 0 : index
    %c0_2 = arith.constant 0 : index
    %1 = vector.load %arg3[%c0_0, %c0_1, %c0_2] : memref<1x8x32xbf16, #tpu.memory_space<vmem>>, vector<1x8x32xbf16>
    %2 = vector.shape_cast %1 : vector<1x8x32xbf16> to vector<8x32xbf16>
    %c0_3 = arith.constant 0 : index
    %c0_4 = arith.constant 0 : index
    %c0_5 = arith.constant 0 : index
    %3 = vector.load %arg4[%c0_3, %c0_4, %c0_5] : memref<1x8x32xbf16, #tpu.memory_space<vmem>>, vector<1x8x32xbf16>
    %4 = vector.shape_cast %3 : vector<1x8x32xbf16> to vector<8x32xbf16>
    %c0_6 = arith.constant 0 : index
    %c0_7 = arith.constant 0 : index
    %5 = vector.load %arg5[%c0_6, %c0_7] : memref<32x128xbf16, #tpu.memory_space<vmem>>, vector<32x128xbf16>
    %cst = arith.constant dense<0.000000e+00> : vector<8x128xf32>
    %6 = tpu.matmul %2, %5, %cst {dimension_numbers = #tpu.dot_dimension_numbers<[1], [0], [0], [1], [0, 0, 1, 1], [], []>} : vector<8x32xbf16>, vector<32x128xbf16>, vector<8x128xf32> -> vector<8x128xf32>
    %c0_8 = arith.constant 0 : index
    %c0_9 = arith.constant 0 : index
    %7 = vector.load %arg6[%c0_8, %c0_9] : memref<32x256xbf16, #tpu.memory_space<vmem>>, vector<32x256xbf16>
    %cst_10 = arith.constant dense<0.000000e+00> : vector<8x256xf32>
    %8 = tpu.matmul %4, %7, %cst_10 {dimension_numbers = #tpu.dot_dimension_numbers<[1], [0], [0], [1], [0, 0, 1, 1], [], []>} : vector<8x32xbf16>, vector<32x256xbf16>, vector<8x256xf32> -> vector<8x256xf32>
    %9 = vector.extract_strided_slice %8 {offsets = [0, 0], sizes = [8, 128], strides = [1, 1]} : vector<8x256xf32> to vector<8x128xf32>
    %10 = vector.extract_strided_slice %8 {offsets = [0, 128], sizes = [8, 128], strides = [1, 1]} : vector<8x256xf32> to vector<8x128xf32>
    %cst_11 = arith.constant 2.500000e-01 : f32
    %11 = vector.broadcast %cst_11 : f32 to vector<8x128xf32>
    %12 = arith.mulf %6, %11 : vector<8x128xf32>
    %13 = vector.shape_cast %12 : vector<8x128xf32> to vector<8x8x16xf32>
    %14 = tpu.transpose %13, [1, 0, 2] : vector<8x8x16xf32> -> vector<8x8x16xf32>
    %15 = arith.truncf %14 : vector<8x8x16xf32> to vector<8x8x16xbf16>
    %16 = vector.shape_cast %9 : vector<8x128xf32> to vector<8x8x16xf32>
    %17 = tpu.transpose %16, [1, 0, 2] : vector<8x8x16xf32> -> vector<8x8x16xf32>
    %18 = arith.truncf %17 : vector<8x8x16xf32> to vector<8x8x16xbf16>
    %19 = vector.shape_cast %10 : vector<8x128xf32> to vector<8x4x32xf32>
    %20 = tpu.transpose %19, [1, 0, 2] : vector<8x4x32xf32> -> vector<4x8x32xf32>
    %21 = arith.truncf %20 : vector<4x8x32xf32> to vector<4x8x32xbf16>
    "tpu.trace_start"() <{level = 10 : i32, message = "hqd,hkd->hqk"}> : () -> ()
    %cst_12 = arith.constant dense<0.000000e+00> : vector<8x8x8xf32>
    %22 = tpu.matmul %15, %18, %cst_12 {dimension_numbers = #tpu.dot_dimension_numbers<[2], [2], [1], [1], [0, 0, 0, 1, 1, 1], [0], [0]>} : vector<8x8x16xbf16>, vector<8x8x16xbf16>, vector<8x8x8xf32> -> vector<8x8x8xf32>
    "tpu.trace_stop"() : () -> ()
    %cst_13 = arith.constant dense<0xFF800000> : vector<8x8xf32>
    %23 = vector.multi_reduction <maximumf>, %22, %cst_13 [2] : vector<8x8x8xf32> to vector<8x8xf32>
    %cst_14 = arith.constant 0xFF800000 : f32
    %24 = vector.broadcast %cst_14 : f32 to vector<8x8xf32>
    %25 = arith.maximumf %24, %23 : vector<8x8xf32>
    %26 = vector.shape_cast %25 : vector<8x8xf32> to vector<8x8x1xf32>
    %27 = vector.broadcast %26 : vector<8x8x1xf32> to vector<8x8x8xf32>
    %28 = arith.subf %22, %27 : vector<8x8x8xf32>
    %29 = math.exp %28 : vector<8x8x8xf32>
    %cst_15 = arith.constant dense<0.000000e+00> : vector<8x8xf32>
    %30 = vector.multi_reduction <add>, %29, %cst_15 [2] : vector<8x8x8xf32> to vector<8x8xf32>
    %31 = vector.shape_cast %30 : vector<8x8xf32> to vector<8x8x1xf32>
    %32 = vector.broadcast %31 : vector<8x8x1xf32> to vector<8x8x8xf32>
    %33 = arith.divf %29, %32 : vector<8x8x8xf32>
    %34 = vector.shape_cast %33 : vector<8x8x8xf32> to vector<4x2x8x8xf32>
    %35 = vector.extract_strided_slice %34 {offsets = [0, 0, 0, 0], sizes = [4, 1, 8, 8], strides = [1, 1, 1, 1]} : vector<4x2x8x8xf32> to vector<4x1x8x8xf32>
    %36 = vector.shape_cast %35 : vector<4x1x8x8xf32> to vector<4x8x8xf32>
    %37 = vector.extract_strided_slice %34 {offsets = [0, 1, 0, 0], sizes = [4, 1, 8, 8], strides = [1, 1, 1, 1]} : vector<4x2x8x8xf32> to vector<4x1x8x8xf32>
    %38 = vector.shape_cast %37 : vector<4x1x8x8xf32> to vector<4x8x8xf32>
    %39 = vector.broadcast %0 : f32 to vector<4x8x8xf32>
    %40 = arith.mulf %39, %38 : vector<4x8x8xf32>
    %41 = arith.subf %36, %40 : vector<4x8x8xf32>
    %42 = arith.truncf %41 : vector<4x8x8xf32> to vector<4x8x8xbf16>
    "tpu.trace_start"() <{level = 10 : i32, message = "hqk,hkd->hqd"}> : () -> ()
    %cst_16 = arith.constant dense<0.000000e+00> : vector<4x8x32xf32>
    %43 = tpu.matmul %42, %21, %cst_16 {dimension_numbers = #tpu.dot_dimension_numbers<[2], [1], [1], [2], [0, 0, 0, 1, 1, 2], [0], [0]>} : vector<4x8x8xbf16>, vector<4x8x32xbf16>, vector<4x8x32xf32> -> vector<4x8x32xf32>
    "tpu.trace_stop"() : () -> ()
    %44 = arith.mulf %43, %43 : vector<4x8x32xf32>
    %cst_17 = arith.constant dense<0.000000e+00> : vector<4x8xf32>
    %45 = vector.multi_reduction <add>, %44, %cst_17 [2] : vector<4x8x32xf32> to vector<4x8xf32>
    %46 = vector.shape_cast %45 : vector<4x8xf32> to vector<4x8x1xf32>
    %cst_18 = arith.constant 3.200000e+01 : f32
    %47 = vector.broadcast %cst_18 : f32 to vector<4x8x1xf32>
    %48 = arith.divf %46, %47 : vector<4x8x1xf32>
    %49 = math.sqrt %48 : vector<4x8x1xf32>
    %cst_19 = arith.constant 9.99999993E-9 : f32
    %50 = vector.broadcast %cst_19 : f32 to vector<4x8x1xf32>
    %51 = arith.addf %49, %50 : vector<4x8x1xf32>
    %52 = tpu.reciprocal %51 {approx = true} : vector<4x8x1xf32> -> vector<4x8x1xf32>
    %c0_20 = arith.constant 0 : index
    %c0_21 = arith.constant 0 : index
    %53 = vector.load %arg8[%c0_20, %c0_21] : memref<1x32xf32, #tpu.memory_space<vmem>>, vector<1x32xf32>
    %cst_22 = arith.constant 0.644490957 : f32
    %54 = vector.broadcast %cst_22 : f32 to vector<1x32xf32>
    %55 = arith.mulf %53, %54 : vector<1x32xf32>
    %56 = vector.broadcast %52 : vector<4x8x1xf32> to vector<4x8x32xf32>
    %57 = arith.mulf %43, %56 : vector<4x8x32xf32>
    %58 = vector.shape_cast %55 : vector<1x32xf32> to vector<1x1x32xf32>
    %59 = vector.broadcast %58 : vector<1x1x32xf32> to vector<4x8x32xf32>
    %60 = arith.mulf %57, %59 : vector<4x8x32xf32>
    %61 = tpu.transpose %60, [1, 0, 2] : vector<4x8x32xf32> -> vector<8x4x32xf32>
    %62 = vector.shape_cast %61 : vector<8x4x32xf32> to vector<8x128xf32>
    %63 = arith.truncf %62 : vector<8x128xf32> to vector<8x128xbf16>
    %c0_23 = arith.constant 0 : index
    %c0_24 = arith.constant 0 : index
    %64 = vector.load %arg7[%c0_23, %c0_24] : memref<128x32xbf16, #tpu.memory_space<vmem>>, vector<128x32xbf16>
    %cst_25 = arith.constant dense<0.000000e+00> : vector<8x32xf32>
    %65 = tpu.matmul %63, %64, %cst_25 {dimension_numbers = #tpu.dot_dimension_numbers<[1], [0], [0], [1], [0, 0, 1, 1], [], []>} : vector<8x128xbf16>, vector<128x32xbf16>, vector<8x32xf32> -> vector<8x32xf32>
    %c0_26 = arith.constant 0 : index
    %c0_27 = arith.constant 0 : index
    %c0_28 = arith.constant 0 : index
    %66 = vector.load %arg9[%c0_26, %c0_27, %c0_28] : memref<1x8x32xf32, #tpu.memory_space<vmem>>, vector<1x8x32xf32>
    %67 = vector.shape_cast %66 : vector<1x8x32xf32> to vector<8x32xf32>
    %68 = vector.shape_cast %65 : vector<8x32xf32> to vector<1x8x32xf32>
    tpu.vector_store %arg9[%c0_26, %c0_27, %c0_28], %68 {strides = array<i32>} : memref<1x8x32xf32, #tpu.memory_space<vmem>>, vector<1x8x32xf32>,
    return
  }
  func.func @transform_0(%arg0: i32, %arg1: i32) -> i32 {
    %c0_i32 = arith.constant 0 : i32
    %c0_i32_0 = arith.constant 0 : i32
    return %c0_i32 : i32
  }
  func.func @transform_1(%arg0: i32, %arg1: i32) -> (i32, i32, i32) {
    %c0_i32 = arith.constant 0 : i32
    %c0_i32_0 = arith.constant 0 : i32
    return %arg0, %arg1, %c0_i32 : i32, i32, i32
  }
  func.func @transform_2(%arg0: i32, %arg1: i32) -> (i32, i32, i32) {
    %c0_i32 = arith.constant 0 : i32
    %c0_i32_0 = arith.constant 0 : i32
    %c0_i32_1 = arith.constant 0 : i32
    return %arg0, %c0_i32, %c0_i32_0 : i32, i32, i32
  }
  func.func @transform_3(%arg0: i32, %arg1: i32) -> (i32, i32) {
    %c0_i32 = arith.constant 0 : i32
    %c0_i32_0 = arith.constant 0 : i32
    %c0_i32_1 = arith.constant 0 : i32
    return %c0_i32, %c0_i32_0 : i32, i32
  }
  func.func @transform_4(%arg0: i32, %arg1: i32) -> (i32, i32) {
    %c0_i32 = arith.constant 0 : i32
    %c0_i32_0 = arith.constant 0 : i32
    %c0_i32_1 = arith.constant 0 : i32
    return %c0_i32, %c0_i32_0 : i32, i32
  }
  func.func @transform_5(%arg0: i32, %arg1: i32) -> (i32, i32) {
    %c0_i32 = arith.constant 0 : i32
    %c0_i32_0 = arith.constant 0 : i32
    %c0_i32_1 = arith.constant 0 : i32
    return %c0_i32, %c0_i32_0 : i32, i32
  }
  func.func @transform_6(%arg0: i32, %arg1: i32) -> (i32, i32) {
    %c0_i32 = arith.constant 0 : i32
    %c0_i32_0 = arith.constant 0 : i32
    %c0_i32_1 = arith.constant 0 : i32
    return %c0_i32, %c0_i32_0 : i32, i32
  }
  func.func @transform_7(%arg0: i32, %arg1: i32) -> (i32, i32, i32) {
    %c0_i32 = arith.constant 0 : i32
    %c0_i32_0 = arith.constant 0 : i32
    return %arg0, %arg1, %c0_i32 : i32, i32, i32
  }
}

</mosaic_0001>

<llo_original>
// kernel: tpu_custom_call.1
$region0: #{tpu_custom_call.1}
  #allocation0 [shape = 'u32[]', space=smem, size = 0x4, offset = 0x4, fixed_abs, tag = 'smem constant byte address 0x4 - core index']
  #allocation1 [shape = 'u32[144,128]{1,0:T(1,128)}', space=vmem, size = 0x12000, scoped, tag = 'internal scratch']
  #allocation2 [shape = 'f32[1]{0:T(128)S(6)}', space=smem, size = 0x200, scoped, tag = 'scoped memory for tpu_custom_call.1']
  %s0 = inlined_call_operand.<no memory space> [shape: f32[1], index: 0, kind: input, shape index: {}]
  %s1 = inlined_call_operand.vmem [shape: bf16[2,8,32], index: 1, kind: input, shape index: {}]
  %s2 = inlined_call_operand.vmem [shape: bf16[2,8,32], index: 2, kind: input, shape index: {}]
  %s3 = inlined_call_operand.vmem [shape: bf16[32,128], index: 3, kind: input, shape index: {}]
  %s4 = inlined_call_operand.vmem [shape: bf16[32,256], index: 4, kind: input, shape index: {}]
  %s5 = inlined_call_operand.vmem [shape: bf16[128,32], index: 5, kind: input, shape index: {}]
  %s6 = inlined_call_operand.vmem [shape: f32[1,32], index: 6, kind: input, shape index: {}]
  %s7 = inlined_call_operand.hbm [shape: f32[2,8,32], index: 7, kind: output, shape index: {}]
  %s8 = sld [smem:[#allocation0]]
  $region61: #{tpu_custom_call.1} parent=0
    _
  %s10 = ssub.s32 1, %s8
  %s11 = scalar_select 0, %s10, %s8
  %12 = sst [smem:[#allocation2]] %s0
  $region1: #{tpu_custom_call.1} parent=0
    #allocation3 [shape = 'u8[8192]{0}', space=vmem, size = 0x2000, scoped, tag = 'output window, operand 0']
    #allocation4 [shape = 's32[2]{0}', space=sflag, size = 0x8, scoped, tag = 'scoped memory for tpu_custom_call.1']
    %13 = vsyncpa [#allocation4], 0
    %s14 = scalar_lea.sflag [#allocation4], 1
    %15 = vsyncpa %s14, 0
    loop: start=0, step=1, limit=4
    $region2: #{tpu_custom_call.1} parent=1 // loop_pre_header
      _
    $region3: #{tpu_custom_call.1} parent=1 // loop_header
      %s17 = sphi 0, %s21
      %p18 = scmp.ge.s32.totalorder %s17, 4
      %s24 = sphi 0, %s36
      %s25 = sphi 0, %s32
      %s26 = sphi 0, %s24
      %s27 = sphi 0, %s25
      %s28 = sphi 0, %s26
      %s29 = sphi 0, %s27
      %s37 = sphi 0, %s37
      %s39 = sphi 0, %s37
      %s40 = sphi 0, %s39
      %s54 = sphi 0, %s40
      %s62 = sphi 0, %s64
      %s65 = sphi 0, %s62
      %s66 = sphi 0, %s65
      %s82 = sphi 0, %s66
      %s88 = sphi 0, %s90
      %s91 = sphi 0, %s88
      %s92 = sphi 0, %s91
      %s108 = sphi 0, %s92
      %s112 = sphi 0, %s112
      %s114 = sphi 0, %s112
      %s115 = sphi 0, %s114
      %s129 = sphi 0, %s115
      %s133 = sphi 0, %s133
      %s135 = sphi 0, %s133
      %s136 = sphi 0, %s135
      %s150 = sphi 0, %s136
      %s154 = sphi 0, %s154
      %s156 = sphi 0, %s154
      %s157 = sphi 0, %s156
      %s171 = sphi 0, %s157
      %s175 = sphi 0, %s175
      %s177 = sphi 0, %s175
      %s178 = sphi 0, %s177
      %s192 = sphi 0, %s178
      %s200 = sphi 0, %s202
      %s203 = sphi 0, %s200
      %s204 = sphi 0, %s203
      %s220 = sphi 0, %s204
    $region4: #{tpu_custom_call.1} parent=1 // loop_header_branch
      %20 = sbr.rel (%p18) target = $region8
    $region5: #{tpu_custom_call.1} parent=1 // loop_body
      %s22 = ssub.s32 %s17, 1
      %s23 = ssub.s32 %s17, 2
      %s30 = sadd.s32 1, %s25
      %p31 = scmp.ge.s32.totalorder %s30, 1
      %s32 = scalar_select %p31, 0, %s30
      %s33 = sadd.s32 1, %s24
      %s34 = scalar_select %p31, %s33, %s24
      %p35 = scmp.ge.s32.totalorder %s34, 2
      %s36 = scalar_select %p35, 0, %s34
      %s38 = sadd.s32 %s37, 1
      %p41 = scmp.eq.s32.totalorder %s17, 1
      %p42 = scmp.ne.s32.totalorder %s37, %s39
      %p43 = scmp.eq.s32.totalorder %s17, 0
      %p44 = por %p42, %p43
      %p45 = scmp.ne.s32.totalorder %s37, %s39
      %p46 = scmp.eq.s32.totalorder %s22, 1
      %p47 = por %p45, %p46
      %p48 = scmp.ne.s32.totalorder %s39, %s40
      %p49 = scmp.eq.s32.totalorder %s22, 0
      %p50 = por %p48, %p49
      %p51 = scmp.ne.s32.totalorder %s39, %s40
      %p52 = scmp.eq.s32.totalorder %s23, 1
      %p53 = por %p51, %p52
      %p55 = scmp.ne.s32.totalorder %s40, %s54
      %p56 = scmp.eq.s32.totalorder %s23, 0
      %p57 = por %p55, %p56
      %s58 = ssub.s32 %s24, %s36
      %s59 = ssub.s32 %s25, %s32
      %s60 = sor.u32 %s58, %s59
      %p61 = scmp.eq.s32.totalorder %s60, 0
      %s63 = sadd.s32 %s62, 1
      %s64 = scalar_select %p61, %s62, %s63
      %p67 = pneg %p61
      %p68 = scmp.eq.s32.totalorder %s17, 1
      %p69 = por %p67, %p68
      %p70 = scmp.ne.s32.totalorder %s62, %s65
      %p71 = scmp.eq.s32.totalorder %s17, 0
      %p72 = por %p70, %p71
      %p73 = scmp.ne.s32.totalorder %s62, %s65
      %p74 = scmp.eq.s32.totalorder %s22, 1
      %p75 = por %p73, %p74
      %p76 = scmp.ne.s32.totalorder %s65, %s66
      %p77 = scmp.eq.s32.totalorder %s22, 0
      %p78 = por %p76, %p77
      %p79 = scmp.ne.s32.totalorder %s65, %s66
      %p80 = scmp.eq.s32.totalorder %s23, 1
      %p81 = por %p79, %p80
      %p83 = scmp.ne.s32.totalorder %s66, %s82
      %p84 = scmp.eq.s32.totalorder %s23, 0
      %p85 = por %p83, %p84
      %s86 = ssub.s32 %s24, %s36
      %p87 = scmp.eq.s32.totalorder %s86, 0
      %s89 = sadd.s32 %s88, 1
      %s90 = scalar_select %p87, %s88, %s89
      %p93 = pneg %p87
      %p94 = scmp.eq.s32.totalorder %s17, 1
      %p95 = por %p93, %p94
      %p96 = scmp.ne.s32.totalorder %s88, %s91
      %p97 = scmp.eq.s32.totalorder %s17, 0
      %p98 = por %p96, %p97
      %p99 = scmp.ne.s32.totalorder %s88, %s91
      %p100 = scmp.eq.s32.totalorder %s22, 1
      %p101 = por %p99, %p100
      %p102 = scmp.ne.s32.totalorder %s91, %s92
      %p103 = scmp.eq.s32.totalorder %s22, 0
      %p104 = por %p102, %p103
      %p105 = scmp.ne.s32.totalorder %s91, %s92
      %p106 = scmp.eq.s32.totalorder %s23, 1
      %p107 = por %p105, %p106
      %p109 = scmp.ne.s32.totalorder %s92, %s108
      %p110 = scmp.eq.s32.totalorder %s23, 0
      %p111 = por %p109, %p110
      %s113 = sadd.s32 %s112, 1
      %p116 = scmp.eq.s32.totalorder %s17, 1
      %p117 = scmp.ne.s32.totalorder %s112, %s114
      %p118 = scmp.eq.s32.totalorder %s17, 0
      %p119 = por %p117, %p118
      %p120 = scmp.ne.s32.totalorder %s112, %s114
      %p121 = scmp.eq.s32.totalorder %s22, 1
      %p122 = por %p120, %p121
      %p123 = scmp.ne.s32.totalorder %s114, %s115
      %p124 = scmp.eq.s32.totalorder %s22, 0
      %p125 = por %p123, %p124
      %p126 = scmp.ne.s32.totalorder %s114, %s115
      %p127 = scmp.eq.s32.totalorder %s23, 1
      %p128 = por %p126, %p127
      %p130 = scmp.ne.s32.totalorder %s115, %s129
      %p131 = scmp.eq.s32.totalorder %s23, 0
      %p132 = por %p130, %p131
      %s134 = sadd.s32 %s133, 1
      %p137 = scmp.eq.s32.totalorder %s17, 1
      %p138 = scmp.ne.s32.totalorder %s133, %s135
      %p139 = scmp.eq.s32.totalorder %s17, 0
      %p140 = por %p138, %p139
      %p141 = scmp.ne.s32.totalorder %s133, %s135
      %p142 = scmp.eq.s32.totalorder %s22, 1
      %p143 = por %p141, %p142
      %p144 = scmp.ne.s32.totalorder %s135, %s136
      %p145 = scmp.eq.s32.totalorder %s22, 0
      %p146 = por %p144, %p145
      %p147 = scmp.ne.s32.totalorder %s135, %s136
      %p148 = scmp.eq.s32.totalorder %s23, 1
      %p149 = por %p147, %p148
      %p151 = scmp.ne.s32.totalorder %s136, %s150
      %p152 = scmp.eq.s32.totalorder %s23, 0
      %p153 = por %p151, %p152
      %s155 = sadd.s32 %s154, 1
      %p158 = scmp.eq.s32.totalorder %s17, 1
      %p159 = scmp.ne.s32.totalorder %s154, %s156
      %p160 = scmp.eq.s32.totalorder %s17, 0
      %p161 = por %p159, %p160
      %p162 = scmp.ne.s32.totalorder %s154, %s156
      %p163 = scmp.eq.s32.totalorder %s22, 1
      %p164 = por %p162, %p163
      %p165 = scmp.ne.s32.totalorder %s156, %s157
      %p166 = scmp.eq.s32.totalorder %s22, 0
      %p167 = por %p165, %p166
      %p168 = scmp.ne.s32.totalorder %s156, %s157
      %p169 = scmp.eq.s32.totalorder %s23, 1
      %p170 = por %p168, %p169
      %p172 = scmp.ne.s32.totalorder %s157, %s171
      %p173 = scmp.eq.s32.totalorder %s23, 0
      %p174 = por %p172, %p173
      %s176 = sadd.s32 %s175, 1
      %p179 = scmp.eq.s32.totalorder %s17, 1
      %p180 = scmp.ne.s32.totalorder %s175, %s177
      %p181 = scmp.eq.s32.totalorder %s17, 0
      %p182 = por %p180, %p181
      %p183 = scmp.ne.s32.totalorder %s175, %s177
      %p184 = scmp.eq.s32.totalorder %s22, 1
      %p185 = por %p183, %p184
      %p186 = scmp.ne.s32.totalorder %s177, %s178
      %p187 = scmp.eq.s32.totalorder %s22, 0
      %p188 = por %p186, %p187
      %p189 = scmp.ne.s32.totalorder %s177, %s178
      %p190 = scmp.eq.s32.totalorder %s23, 1
      %p191 = por %p189, %p190
      %p193 = scmp.ne.s32.totalorder %s178, %s192
      %p194 = scmp.eq.s32.totalorder %s23, 0
      %p195 = por %p193, %p194
      %s196 = ssub.s32 %s24, %s36
      %s197 = ssub.s32 %s25, %s32
      %s198 = sor.u32 %s196, %s197
      %p199 = scmp.eq.s32.totalorder %s198, 0
      %s201 = sadd.s32 %s200, 1
      %s202 = scalar_select %p199, %s200, %s201
      %p205 = pneg %p199
      %p206 = scmp.eq.s32.totalorder %s17, 1
      %p207 = por %p205, %p206
      %p208 = scmp.ne.s32.totalorder %s200, %s203
      %p209 = scmp.eq.s32.totalorder %s17, 0
      %p210 = por %p208, %p209
      %p211 = scmp.ne.s32.totalorder %s200, %s203
      %p212 = scmp.eq.s32.totalorder %s22, 1
      %p213 = por %p211, %p212
      %p214 = scmp.ne.s32.totalorder %s203, %s204
      %p215 = scmp.eq.s32.totalorder %s22, 0
      %p216 = por %p214, %p215
      %p217 = scmp.ne.s32.totalorder %s203, %s204
      %p218 = scmp.eq.s32.totalorder %s23, 1
      %p219 = por %p217, %p218
      %p221 = scmp.ne.s32.totalorder %s204, %s220
      %p222 = scmp.eq.s32.totalorder %s23, 0
      %p223 = por %p221, %p222
      %p224 = scmp.le.s32.totalorder 1, %s17
      %p225 = scmp.lt.s32.totalorder %s17, 3
      %p226 = pnand %p224, %p225
      %p227 = pneg %p226
      // Predicated region
      $region9: #{tpu_custom_call.1} parent=5 // pred_check
        _
      $region10: #{tpu_custom_call.1} parent=5 // pred_check_branch
        %229 = sbr.rel (%p226) target = $region12
      $region11: #{tpu_custom_call.1} parent=5 // pred_region
        %s230 = ssub.s32 %s17, 1
        // Predicated region
        $region13: #{tpu_custom_call.1} parent=11 // pred_check
          %p231 = pneg %p50
        $region14: #{tpu_custom_call.1} parent=11 // pred_check_branch
          %233 = sbr.rel (%p231) target = $region16
        $region15: #{tpu_custom_call.1} parent=11 // pred_region
          _
        $region16: #{tpu_custom_call.1} parent=11 // pred_fallthru
          _
        // Predicated region
        $region17: #{tpu_custom_call.1} parent=11 // pred_check
          %p234 = pneg %p125
        $region18: #{tpu_custom_call.1} parent=11 // pred_check_branch
          %236 = sbr.rel (%p234) target = $region20
        $region19: #{tpu_custom_call.1} parent=11 // pred_region
          _
        $region20: #{tpu_custom_call.1} parent=11 // pred_fallthru
          _
        // Predicated region
        $region21: #{tpu_custom_call.1} parent=11 // pred_check
          %p237 = pneg %p146
        $region22: #{tpu_custom_call.1} parent=11 // pred_check_branch
          %239 = sbr.rel (%p237) target = $region24
        $region23: #{tpu_custom_call.1} parent=11 // pred_region
          _
        $region24: #{tpu_custom_call.1} parent=11 // pred_fallthru
          _
        // Predicated region
        $region25: #{tpu_custom_call.1} parent=11 // pred_check
          %p240 = pneg %p167
        $region26: #{tpu_custom_call.1} parent=11 // pred_check_branch
          %242 = sbr.rel (%p240) target = $region28
        $region27: #{tpu_custom_call.1} parent=11 // pred_region
          _
        $region28: #{tpu_custom_call.1} parent=11 // pred_fallthru
          _
        // Predicated region
        $region29: #{tpu_custom_call.1} parent=11 // pred_check
          %p243 = pneg %p188
        $region30: #{tpu_custom_call.1} parent=11 // pred_check_branch
          %245 = sbr.rel (%p243) target = $region32
        $region31: #{tpu_custom_call.1} parent=11 // pred_region
          _
        $region32: #{tpu_custom_call.1} parent=11 // pred_fallthru
          _
      $region12: #{tpu_custom_call.1} parent=5 // pred_fallthru
        _
      %p246 = scmp.lt.s32.totalorder %s17, 2
      // Predicated region
      $region33: #{tpu_custom_call.1} parent=5 // pred_check
        %p247 = pneg %p246
      $region34: #{tpu_custom_call.1} parent=5 // pred_check_branch
        %249 = sbr.rel (%p247) target = $region36
      $region35: #{tpu_custom_call.1} parent=5 // pred_region
        // Predicated region
        $region37: #{tpu_custom_call.1} parent=35 // pred_check
          %p250 = pneg %p72
        $region38: #{tpu_custom_call.1} parent=35 // pred_check_branch
          %252 = sbr.rel (%p250) target = $region40
        $region39: #{tpu_custom_call.1} parent=35 // pred_region
          %p253 = scmp.lt.s32.totalorder %s24, 1
          %s254 = scalar_select %p253, %s24, 1
          %p255 = scmp.lt.s32.totalorder %s25, 0
          %s256 = scalar_select %p255, %s25, 0
          %s257 = sadd.s32 %s256, %s254
          %s258 = smul.addr %s257, 4
          %s259 = scalar_lea.vmem %s1, %s258
        $region40: #{tpu_custom_call.1} parent=35 // pred_fallthru
          _
        // Predicated region
        $region41: #{tpu_custom_call.1} parent=35 // pred_check
          %p260 = pneg %p98
        $region42: #{tpu_custom_call.1} parent=35 // pred_check_branch
          %262 = sbr.rel (%p260) target = $region44
        $region43: #{tpu_custom_call.1} parent=35 // pred_region
          %p263 = scmp.lt.s32.totalorder %s24, 1
          %s264 = scalar_select %p263, %s24, 1
          %s265 = smul.addr %s264, 4
          %s266 = scalar_lea.vmem %s2, %s265
        $region44: #{tpu_custom_call.1} parent=35 // pred_fallthru
          _
      $region36: #{tpu_custom_call.1} parent=5 // pred_fallthru
        _
      %p267 = scmp.le.s32.totalorder 1, %s17
      %p268 = scmp.lt.s32.totalorder %s17, 3
      %p269 = pnand %p267, %p268
      %p270 = pneg %p269
      // Predicated region
      $region45: #{tpu_custom_call.1} parent=5 // pred_check
        _
      $region46: #{tpu_custom_call.1} parent=5 // pred_check_branch
        %272 = sbr.rel (%p269) target = $region48
      $region47: #{tpu_custom_call.1} parent=5 // pred_region
        %s273 = ssub.s32 %s17, 1
        %p274 = pneg %p50
        %p275 = pneg %p47
        %p276 = scmp.lt.s32.totalorder %s26, 1
        %s277 = scalar_select %p276, %s26, 1
        %p278 = scmp.lt.s32.totalorder %s27, 0
        %s279 = scalar_select %p278, %s27, 0
        %s280 = sadd.s32 %s279, %s277
        %s281 = smul.addr %s280, 4
        %s282 = scalar_lea.vmem %s1, %s281
        %p283 = pneg %p78
        %p284 = pneg %p75
        %p285 = scmp.lt.s32.totalorder %s26, 1
        %s286 = scalar_select %p285, %s26, 1
        %s287 = smul.addr %s286, 4
        %s288 = scalar_lea.vmem %s2, %s287
        %p289 = pneg %p104
        %p290 = pneg %p101
        %p291 = pneg %p125
        %p292 = pneg %p122
        %p293 = pneg %p146
        %p294 = pneg %p143
        %p295 = pneg %p167
        %p296 = pneg %p164
        %p297 = pneg %p188
        %p298 = pneg %p185
        %p299 = pneg %p216
        %p300 = pneg %p213
        %s301 = sand.u32 %s203, 1
        %s302 = scalar_lea.sflag [#allocation4], %s301
        %s303 = sand.u32 %s203, 1
        %s304 = smul.addr %s303, 8
        %s305 = scalar_lea.vmem [#allocation3], %s304
        %p306 = scmp.lt.s32.totalorder %s26, 1
        %s307 = scalar_select %p306, %s26, 1
        %p308 = scmp.lt.s32.totalorder %s27, 0
        %s309 = scalar_select %p308, %s27, 0
        %s310 = sadd.s32 %s309, %s307
        %s311 = smul.addr %s310, 4
        %s312 = scalar_lea.vmem %s1, %s311
        %p313 = scmp.lt.s32.totalorder %s26, 1
        %s314 = scalar_select %p313, %s26, 1
        %s315 = smul.addr %s314, 4
        %s316 = scalar_lea.vmem %s2, %s315
        %s318 = sld [smem:[#allocation2]]
        %v319 = vld [vmem:[%s312] sm:$0xf]
        %v320 = vld [vmem:[%s316] sm:$0xf]
        %v321 = vld [vmem:[%s3] sm:$0xf]
        %v322 = vld [vmem:[%s3 + $0x4] sm:$0xf]
        %v323 = vld [vmem:[%s3 + $0x8] sm:$0xf]
        %v324 = vld [vmem:[%s3 + $0xc] sm:$0xf]
        %v329 = vunpack.c.l.b16 %v321
        %v330 = vunpack.c.l.b16 %v322
        %v331 = vunpack.c.l.b16 %v323
        %v332 = vunpack.c.l.b16 %v324
        %v333 = vpack.c.b16 %v330, %v329
        %v334 = vpack.c.b16 %v332, %v331
        %vm337 = vcmask 261120
        %v339 = vsel %vm337, %v319, 0
        %341 = vmatprep.subr.bf16.mxu0 0
        %342 = vmatpush1.bf16.msra.mxu0 %v333
        %343 = vmatprep.subr.bf16.mxu0 0
        %344 = vmatpush1.bf16.msra.mxu0 %v334
        %345 = vmatprep.subr.bf16.mxu0 0
        %346 = vmatpush1.bf16.msra.mxu0 0
        %347 = vmatprep.subr.bf16.mxu0 0
        %348 = vmatpush1.bf16.msra.mxu0 0
        %349 = vmatprep.subr.bf16.mxu0 0
        %350 = vmatpush1.bf16.msra.mxu0 0
        %351 = vmatprep.subr.bf16.mxu0 0
        %352 = vmatpush1.bf16.msra.mxu0 0
        %353 = vmatprep.subr.bf16.mxu0 0
        %354 = vmatpush1.bf16.msra.mxu0 0
        %355 = vmatprep.subr.bf16.mxu0 0
        %356 = vmatpush1.bf16.msra.mxu0 0
        %357 = vmatprep.subr.bf16.mxu0 0
        %358 = vmatpush1.bf16.msra.mxu0 0
        %359 = vmatprep.subr.bf16.mxu0 0
        %360 = vmatpush1.bf16.msra.mxu0 0
        %361 = vmatprep.subr.bf16.mxu0 0
        %362 = vmatpush1.bf16.msra.mxu0 0
        %363 = vmatprep.subr.bf16.mxu0 0
        %364 = vmatpush1.bf16.msra.mxu0 0
        %365 = vmatprep.subr.bf16.mxu0 0
        %366 = vmatpush1.bf16.msra.mxu0 0
        %367 = vmatprep.subr.bf16.mxu0 0
        %368 = vmatpush1.bf16.msra.mxu0 0
        %369 = vmatprep.subr.bf16.mxu0 0
        %370 = vmatpush1.bf16.msra.mxu0 0
        %371 = vmatprep.subr.bf16.mxu0 0
        %372 = vmatpush1.bf16.msra.mxu0 0
        %373 = vmatprep.mubr.bf16.mxu0 0
        %374 = vmatmul.mubr.bf16.gmra.mrb[0].mxu0 %v339
        %v375 = vpop.f32.mrb[0].mxu0
        %v376 = vadd.f32 0.0, %v375
        %v377 = vpop.f32.mrb[0].mxu0
        %v378 = vpop.f32.mrb[0].mxu0
        %v379 = vpop.f32.mrb[0].mxu0
        %380 = vdwg.mxu0
        %v381 = vld [vmem:[%s4] sm:$0xff]
        %v382 = vld [vmem:[%s4 + $0x8] sm:$0xff]
        %v383 = vld [vmem:[%s4 + $0x10] sm:$0xff]
        %v384 = vld [vmem:[%s4 + $0x18] sm:$0xff]
        %v389 = vunpack.c.l.b16 %v381
        %v390 = vunpack.c.h.b16 %v381
        %v391 = vunpack.c.l.b16 %v382
        %v392 = vunpack.c.h.b16 %v382
        %v393 = vunpack.c.l.b16 %v383
        %v394 = vunpack.c.h.b16 %v383
        %v395 = vunpack.c.l.b16 %v384
        %v396 = vunpack.c.h.b16 %v384
        %v397 = vpack.c.b16 %v391, %v389
        %v398 = vpack.c.b16 %v392, %v390
        %v399 = vpack.c.b16 %v395, %v393
        %v400 = vpack.c.b16 %v396, %v394
        %v406 = vsel %vm337, %v320, 0
        %408 = vmatprep.subr.bf16.mxu0 %v398
        %409 = vmatpush1.bf16.msra.mxu0 %v397
        %410 = vmatprep.subr.bf16.mxu0 %v400
        %411 = vmatpush1.bf16.msra.mxu0 %v399
        %412 = vmatprep.subr.bf16.mxu0 0
        %413 = vmatpush1.bf16.msra.mxu0 0
        %414 = vmatprep.subr.bf16.mxu0 0
        %415 = vmatpush1.bf16.msra.mxu0 0
        %416 = vmatprep.subr.bf16.mxu0 0
        %417 = vmatpush1.bf16.msra.mxu0 0
        %418 = vmatprep.subr.bf16.mxu0 0
        %419 = vmatpush1.bf16.msra.mxu0 0
        %420 = vmatprep.subr.bf16.mxu0 0
        %421 = vmatpush1.bf16.msra.mxu0 0
        %422 = vmatprep.subr.bf16.mxu0 0
        %423 = vmatpush1.bf16.msra.mxu0 0
        %424 = vmatprep.subr.bf16.mxu0 0
        %425 = vmatpush1.bf16.msra.mxu0 0
        %426 = vmatprep.subr.bf16.mxu0 0
        %427 = vmatpush1.bf16.msra.mxu0 0
        %428 = vmatprep.subr.bf16.mxu0 0
        %429 = vmatpush1.bf16.msra.mxu0 0
        %430 = vmatprep.subr.bf16.mxu0 0
        %431 = vmatpush1.bf16.msra.mxu0 0
        %432 = vmatprep.subr.bf16.mxu0 0
        %433 = vmatpush1.bf16.msra.mxu0 0
        %434 = vmatprep.subr.bf16.mxu0 0
        %435 = vmatpush1.bf16.msra.mxu0 0
        %436 = vmatprep.subr.bf16.mxu0 0
        %437 = vmatpush1.bf16.msra.mxu0 0
        %438 = vmatprep.subr.bf16.mxu0 0
        %439 = vmatpush1.bf16.msra.mxu0 0
        %440 = vmatprep.mubr.bf16.mxu0 0
        %441 = vmatmul.mubr.bf16.gmra.mrb[0].mxu0 %v406
        %v442 = vpop.f32.mrb[0].mxu0
        %v443 = vadd.f32 0.0, %v442
        %v444 = vpop.f32.mrb[0].mxu0
        %v445 = vadd.f32 0.0, %v444
        %v446 = vpop.f32.mrb[0].mxu0
        %v447 = vpop.f32.mrb[0].mxu0
        %448 = vdwg.mxu0
        %v449 = vmul.f32 %v376, 0.25
        %451 = vrot.lane.b32.xlu0 %v449, 112
        %v452 = vpop.permute.xlu0 %451
        %454 = vrot.lane.b32.xlu0 %v449, 96
        %v455 = vpop.permute.xlu0 %454
        %457 = vrot.lane.b32.xlu0 %v449, 80
        %v458 = vpop.permute.xlu0 %457
        %460 = vrot.lane.b32.xlu0 %v449, 64
        %v461 = vpop.permute.xlu0 %460
        %463 = vrot.lane.b32.xlu0 %v449, 48
        %v464 = vpop.permute.xlu0 %463
        %466 = vrot.lane.b32.xlu0 %v449, 32
        %v467 = vpop.permute.xlu0 %466
        %469 = vrot.lane.b32.xlu0 %v449, 16
        %v470 = vpop.permute.xlu0 %469
        %v472 = vcombine.low %v449, %v455
        %v473 = vcombine.high %v449, %v455
        %v475 = vunpack.c.l.s4 1983009808
        %v476 = vunpack.c.0.s8 %v475
        %v477 = vlaneseq
        %v478 = vshrl.u32 %v477, 7
        %v479 = vsub.s32 %v476, %v478
        %v480 = vrot.slane %v472, %v479
        %v482 = vunpack.c.l.s4 1983009808
        %v483 = vunpack.c.0.s8 %v482
        %v484 = vlaneseq
        %v485 = vshrl.u32 %v484, 7
        %v486 = vsub.s32 %v483, %v485
        %v487 = vrot.slane %v473, %v486
        %v488 = vcombine.low %v452, %v458
        %v489 = vcombine.high %v452, %v458
        %v491 = vunpack.c.l.s4 1983009808
        %v492 = vunpack.c.0.s8 %v491
        %v493 = vlaneseq
        %v494 = vshrl.u32 %v493, 7
        %v495 = vsub.s32 %v492, %v494
        %v496 = vrot.slane %v488, %v495
        %v498 = vunpack.c.l.s4 1983009808
        %v499 = vunpack.c.0.s8 %v498
        %v500 = vlaneseq
        %v501 = vshrl.u32 %v500, 7
        %v502 = vsub.s32 %v499, %v501
        %v503 = vrot.slane %v489, %v502
        %v504 = vcombine.low %v461, %v467
        %v505 = vcombine.high %v461, %v467
        %v507 = vunpack.c.l.s4 1983009808
        %v508 = vunpack.c.0.s8 %v507
        %v509 = vlaneseq
        %v510 = vshrl.u32 %v509, 7
        %v511 = vsub.s32 %v508, %v510
        %v512 = vrot.slane %v504, %v511
        %v514 = vunpack.c.l.s4 1983009808
        %v515 = vunpack.c.0.s8 %v514
        %v516 = vlaneseq
        %v517 = vshrl.u32 %v516, 7
        %v518 = vsub.s32 %v515, %v517
        %v519 = vrot.slane %v505, %v518
        %v520 = vcombine.low %v464, %v470
        %v521 = vcombine.high %v464, %v470
        %v523 = vunpack.c.l.s4 1983009808
        %v524 = vunpack.c.0.s8 %v523
        %v525 = vlaneseq
        %v526 = vshrl.u32 %v525, 7
        %v527 = vsub.s32 %v524, %v526
        %v528 = vrot.slane %v520, %v527
        %v530 = vunpack.c.l.s4 1983009808
        %v531 = vunpack.c.0.s8 %v530
        %v532 = vlaneseq
        %v533 = vshrl.u32 %v532, 7
        %v534 = vsub.s32 %v531, %v533
        %v535 = vrot.slane %v521, %v534
        %v536 = vcombine.low %v480, %v496
        %v537 = vcombine.high %v480, %v496
        %v539 = vunpack.c.l.s4 1934713408
        %v540 = vunpack.c.0.s8 %v539
        %v541 = vlaneseq
        %v542 = vshrl.u32 %v541, 7
        %v543 = vsub.s32 %v540, %v542
        %v544 = vrot.slane %v536, %v543
        %v546 = vunpack.c.l.s4 1934713408
        %v547 = vunpack.c.0.s8 %v546
        %v548 = vlaneseq
        %v549 = vshrl.u32 %v548, 7
        %v550 = vsub.s32 %v547, %v549
        %v551 = vrot.slane %v537, %v550
        %v552 = vcombine.low %v487, %v503
        %v553 = vcombine.high %v487, %v503
        %v555 = vunpack.c.l.s4 1934713408
        %v556 = vunpack.c.0.s8 %v555
        %v557 = vlaneseq
        %v558 = vshrl.u32 %v557, 7
        %v559 = vsub.s32 %v556, %v558
        %v560 = vrot.slane %v552, %v559
        %v562 = vunpack.c.l.s4 1934713408
        %v563 = vunpack.c.0.s8 %v562
        %v564 = vlaneseq
        %v565 = vshrl.u32 %v564, 7
        %v566 = vsub.s32 %v563, %v565
        %v567 = vrot.slane %v553, %v566
        %v568 = vcombine.low %v512, %v528
        %v569 = vcombine.high %v512, %v528
        %v571 = vunpack.c.l.s4 1934713408
        %v572 = vunpack.c.0.s8 %v571
        %v573 = vlaneseq
        %v574 = vshrl.u32 %v573, 7
        %v575 = vsub.s32 %v572, %v574
        %v576 = vrot.slane %v568, %v575
        %v578 = vunpack.c.l.s4 1934713408
        %v579 = vunpack.c.0.s8 %v578
        %v580 = vlaneseq
        %v581 = vshrl.u32 %v580, 7
        %v582 = vsub.s32 %v579, %v581
        %v583 = vrot.slane %v569, %v582
        %v584 = vcombine.low %v519, %v535
        %v585 = vcombine.high %v519, %v535
        %v587 = vunpack.c.l.s4 1934713408
        %v588 = vunpack.c.0.s8 %v587
        %v589 = vlaneseq
        %v590 = vshrl.u32 %v589, 7
        %v591 = vsub.s32 %v588, %v590
        %v592 = vrot.slane %v584, %v591
        %v594 = vunpack.c.l.s4 1934713408
        %v595 = vunpack.c.0.s8 %v594
        %v596 = vlaneseq
        %v597 = vshrl.u32 %v596, 7
        %v598 = vsub.s32 %v595, %v597
        %v599 = vrot.slane %v585, %v598
        %v600 = vcombine.low %v544, %v576
        %v601 = vcombine.high %v544, %v576
        %v602 = vcombine.low %v551, %v583
        %v603 = vcombine.high %v551, %v583
        %v604 = vcombine.low %v560, %v592
        %v605 = vcombine.high %v560, %v592
        %v606 = vcombine.low %v567, %v599
        %v607 = vcombine.high %v567, %v599
        %v608 = vcombine.low %v600, %v602
        %v609 = vcombine.high %v600, %v602
        %v611 = vunpack.c.l.s4 1983009808
        %v612 = vunpack.c.0.s8 %v611
        %v613 = vlaneseq
        %v614 = vshrl.u32 %v613, 7
        %v615 = vsub.s32 %v612, %v614
        %v616 = vrot.slane %v608, %v615
        %v618 = vunpack.c.l.s4 1983009808
        %v619 = vunpack.c.0.s8 %v618
        %v620 = vlaneseq
        %v621 = vshrl.u32 %v620, 7
        %v622 = vsub.s32 %v619, %v621
        %v623 = vrot.slane %v609, %v622
        %v624 = vcombine.low %v601, %v603
        %v625 = vcombine.high %v601, %v603
        %v627 = vunpack.c.l.s4 1983009808
        %v628 = vunpack.c.0.s8 %v627
        %v629 = vlaneseq
        %v630 = vshrl.u32 %v629, 7
        %v631 = vsub.s32 %v628, %v630
        %v632 = vrot.slane %v624, %v631
        %v634 = vunpack.c.l.s4 1983009808
        %v635 = vunpack.c.0.s8 %v634
        %v636 = vlaneseq
        %v637 = vshrl.u32 %v636, 7
        %v638 = vsub.s32 %v635, %v637
        %v639 = vrot.slane %v625, %v638
        %v640 = vcombine.low %v604, %v606
        %v641 = vcombine.high %v604, %v606
        %v643 = vunpack.c.l.s4 1983009808
        %v644 = vunpack.c.0.s8 %v643
        %v645 = vlaneseq
        %v646 = vshrl.u32 %v645, 7
        %v647 = vsub.s32 %v644, %v646
        %v648 = vrot.slane %v640, %v647
        %v650 = vunpack.c.l.s4 1983009808
        %v651 = vunpack.c.0.s8 %v650
        %v652 = vlaneseq
        %v653 = vshrl.u32 %v652, 7
        %v654 = vsub.s32 %v651, %v653
        %v655 = vrot.slane %v641, %v654
        %v656 = vcombine.low %v605, %v607
        %v657 = vcombine.high %v605, %v607
        %v659 = vunpack.c.l.s4 1983009808
        %v660 = vunpack.c.0.s8 %v659
        %v661 = vlaneseq
        %v662 = vshrl.u32 %v661, 7
        %v663 = vsub.s32 %v660, %v662
        %v664 = vrot.slane %v656, %v663
        %v666 = vunpack.c.l.s4 1983009808
        %v667 = vunpack.c.0.s8 %v666
        %v668 = vlaneseq
        %v669 = vshrl.u32 %v668, 7
        %v670 = vsub.s32 %v667, %v669
        %v671 = vrot.slane %v657, %v670
        %v672 = vcombine.low %v616, %v632
        %v673 = vcombine.high %v616, %v632
        %v675 = vunpack.c.l.s4 1934713408
        %v676 = vunpack.c.0.s8 %v675
        %v677 = vlaneseq
        %v678 = vshrl.u32 %v677, 7
        %v679 = vsub.s32 %v676, %v678
        %v680 = vrot.slane %v672, %v679
        %v682 = vunpack.c.l.s4 1934713408
        %v683 = vunpack.c.0.s8 %v682
        %v684 = vlaneseq
        %v685 = vshrl.u32 %v684, 7
        %v686 = vsub.s32 %v683, %v685
        %v687 = vrot.slane %v673, %v686
        %v688 = vcombine.low %v623, %v639
        %v689 = vcombine.high %v623, %v639
        %v691 = vunpack.c.l.s4 1934713408
        %v692 = vunpack.c.0.s8 %v691
        %v693 = vlaneseq
        %v694 = vshrl.u32 %v693, 7
        %v695 = vsub.s32 %v692, %v694
        %v696 = vrot.slane %v688, %v695
        %v698 = vunpack.c.l.s4 1934713408
        %v699 = vunpack.c.0.s8 %v698
        %v700 = vlaneseq
        %v701 = vshrl.u32 %v700, 7
        %v702 = vsub.s32 %v699, %v701
        %v703 = vrot.slane %v689, %v702
        %v704 = vcombine.low %v648, %v664
        %v705 = vcombine.high %v648, %v664
        %v707 = vunpack.c.l.s4 1934713408
        %v708 = vunpack.c.0.s8 %v707
        %v709 = vlaneseq
        %v710 = vshrl.u32 %v709, 7
        %v711 = vsub.s32 %v708, %v710
        %v712 = vrot.slane %v704, %v711
        %v714 = vunpack.c.l.s4 1934713408
        %v715 = vunpack.c.0.s8 %v714
        %v716 = vlaneseq
        %v717 = vshrl.u32 %v716, 7
        %v718 = vsub.s32 %v715, %v717
        %v719 = vrot.slane %v705, %v718
        %v720 = vcombine.low %v655, %v671
        %v721 = vcombine.high %v655, %v671
        %v723 = vunpack.c.l.s4 1934713408
        %v724 = vunpack.c.0.s8 %v723
        %v725 = vlaneseq
        %v726 = vshrl.u32 %v725, 7
        %v727 = vsub.s32 %v724, %v726
        %v728 = vrot.slane %v720, %v727
        %v730 = vunpack.c.l.s4 1934713408
        %v731 = vunpack.c.0.s8 %v730
        %v732 = vlaneseq
        %v733 = vshrl.u32 %v732, 7
        %v734 = vsub.s32 %v731, %v733
        %v735 = vrot.slane %v721, %v734
        %v736 = vcombine.low %v680, %v712
        %v737 = vcombine.high %v680, %v712
        %v738 = vcombine.low %v687, %v719
        %v739 = vcombine.high %v687, %v719
        %v740 = vcombine.low %v696, %v728
        %v741 = vcombine.high %v696, %v728
        %v742 = vcombine.low %v703, %v735
        %v743 = vcombine.high %v703, %v735
        %v744 = vpack.c.bf16 %v736, %v736
        %v745 = vpack.c.bf16 %v737, %v737
        %v746 = vpack.c.bf16 %v738, %v738
        %v747 = vpack.c.bf16 %v739, %v739
        %v748 = vpack.c.bf16 %v740, %v740
        %v749 = vpack.c.bf16 %v741, %v741
        %v750 = vpack.c.bf16 %v742, %v742
        %v751 = vpack.c.bf16 %v743, %v743
        %753 = vrot.lane.b32.xlu0 %v443, 112
        %v754 = vpop.permute.xlu0 %753
        %756 = vrot.lane.b32.xlu0 %v443, 96
        %v757 = vpop.permute.xlu0 %756
        %759 = vrot.lane.b32.xlu0 %v443, 80
        %v760 = vpop.permute.xlu0 %759
        %762 = vrot.lane.b32.xlu0 %v443, 64
        %v763 = vpop.permute.xlu0 %762
        %765 = vrot.lane.b32.xlu0 %v443, 48
        %v766 = vpop.permute.xlu0 %765
        %768 = vrot.lane.b32.xlu0 %v443, 32
        %v769 = vpop.permute.xlu0 %768
        %771 = vrot.lane.b32.xlu0 %v443, 16
        %v772 = vpop.permute.xlu0 %771
        %v774 = vcombine.low %v443, %v757
        %v775 = vcombine.high %v443, %v757
        %v777 = vunpack.c.l.s4 1983009808
        %v778 = vunpack.c.0.s8 %v777
        %v779 = vlaneseq
        %v780 = vshrl.u32 %v779, 7
        %v781 = vsub.s32 %v778, %v780
        %v782 = vrot.slane %v774, %v781
        %v784 = vunpack.c.l.s4 1983009808
        %v785 = vunpack.c.0.s8 %v784
        %v786 = vlaneseq
        %v787 = vshrl.u32 %v786, 7
        %v788 = vsub.s32 %v785, %v787
        %v789 = vrot.slane %v775, %v788
        %v790 = vcombine.low %v754, %v760
        %v791 = vcombine.high %v754, %v760
        %v793 = vunpack.c.l.s4 1983009808
        %v794 = vunpack.c.0.s8 %v793
        %v795 = vlaneseq
        %v796 = vshrl.u32 %v795, 7
        %v797 = vsub.s32 %v794, %v796
        %v798 = vrot.slane %v790, %v797
        %v800 = vunpack.c.l.s4 1983009808
        %v801 = vunpack.c.0.s8 %v800
        %v802 = vlaneseq
        %v803 = vshrl.u32 %v802, 7
        %v804 = vsub.s32 %v801, %v803
        %v805 = vrot.slane %v791, %v804
        %v806 = vcombine.low %v763, %v769
        %v807 = vcombine.high %v763, %v769
        %v809 = vunpack.c.l.s4 1983009808
        %v810 = vunpack.c.0.s8 %v809
        %v811 = vlaneseq
        %v812 = vshrl.u32 %v811, 7
        %v813 = vsub.s32 %v810, %v812
        %v814 = vrot.slane %v806, %v813
        %v816 = vunpack.c.l.s4 1983009808
        %v817 = vunpack.c.0.s8 %v816
        %v818 = vlaneseq
        %v819 = vshrl.u32 %v818, 7
        %v820 = vsub.s32 %v817, %v819
        %v821 = vrot.slane %v807, %v820
        %v822 = vcombine.low %v766, %v772
        %v823 = vcombine.high %v766, %v772
        %v825 = vunpack.c.l.s4 1983009808
        %v826 = vunpack.c.0.s8 %v825
        %v827 = vlaneseq
        %v828 = vshrl.u32 %v827, 7
        %v829 = vsub.s32 %v826, %v828
        %v830 = vrot.slane %v822, %v829
        %v832 = vunpack.c.l.s4 1983009808
        %v833 = vunpack.c.0.s8 %v832
        %v834 = vlaneseq
        %v835 = vshrl.u32 %v834, 7
        %v836 = vsub.s32 %v833, %v835
        %v837 = vrot.slane %v823, %v836
        %v838 = vcombine.low %v782, %v798
        %v839 = vcombine.high %v782, %v798
        %v841 = vunpack.c.l.s4 1934713408
        %v842 = vunpack.c.0.s8 %v841
        %v843 = vlaneseq
        %v844 = vshrl.u32 %v843, 7
        %v845 = vsub.s32 %v842, %v844
        %v846 = vrot.slane %v838, %v845
        %v848 = vunpack.c.l.s4 1934713408
        %v849 = vunpack.c.0.s8 %v848
        %v850 = vlaneseq
        %v851 = vshrl.u32 %v850, 7
        %v852 = vsub.s32 %v849, %v851
        %v853 = vrot.slane %v839, %v852
        %v854 = vcombine.low %v789, %v805
        %v855 = vcombine.high %v789, %v805
        %v857 = vunpack.c.l.s4 1934713408
        %v858 = vunpack.c.0.s8 %v857
        %v859 = vlaneseq
        %v860 = vshrl.u32 %v859, 7
        %v861 = vsub.s32 %v858, %v860
        %v862 = vrot.slane %v854, %v861
        %v864 = vunpack.c.l.s4 1934713408
        %v865 = vunpack.c.0.s8 %v864
        %v866 = vlaneseq
        %v867 = vshrl.u32 %v866, 7
        %v868 = vsub.s32 %v865, %v867
        %v869 = vrot.slane %v855, %v868
        %v870 = vcombine.low %v814, %v830
        %v871 = vcombine.high %v814, %v830
        %v873 = vunpack.c.l.s4 1934713408
        %v874 = vunpack.c.0.s8 %v873
        %v875 = vlaneseq
        %v876 = vshrl.u32 %v875, 7
        %v877 = vsub.s32 %v874, %v876
        %v878 = vrot.slane %v870, %v877
        %v880 = vunpack.c.l.s4 1934713408
        %v881 = vunpack.c.0.s8 %v880
        %v882 = vlaneseq
        %v883 = vshrl.u32 %v882, 7
        %v884 = vsub.s32 %v881, %v883
        %v885 = vrot.slane %v871, %v884
        %v886 = vcombine.low %v821, %v837
        %v887 = vcombine.high %v821, %v837
        %v889 = vunpack.c.l.s4 1934713408
        %v890 = vunpack.c.0.s8 %v889
        %v891 = vlaneseq
        %v892 = vshrl.u32 %v891, 7
        %v893 = vsub.s32 %v890, %v892
        %v894 = vrot.slane %v886, %v893
        %v896 = vunpack.c.l.s4 1934713408
        %v897 = vunpack.c.0.s8 %v896
        %v898 = vlaneseq
        %v899 = vshrl.u32 %v898, 7
        %v900 = vsub.s32 %v897, %v899
        %v901 = vrot.slane %v887, %v900
        %v902 = vcombine.low %v846, %v878
        %v903 = vcombine.high %v846, %v878
        %v904 = vcombine.low %v853, %v885
        %v905 = vcombine.high %v853, %v885
        %v906 = vcombine.low %v862, %v894
        %v907 = vcombine.high %v862, %v894
        %v908 = vcombine.low %v869, %v901
        %v909 = vcombine.high %v869, %v901
        %v910 = vcombine.low %v902, %v904
        %v911 = vcombine.high %v902, %v904
        %v913 = vunpack.c.l.s4 1983009808
        %v914 = vunpack.c.0.s8 %v913
        %v915 = vlaneseq
        %v916 = vshrl.u32 %v915, 7
        %v917 = vsub.s32 %v914, %v916
        %v918 = vrot.slane %v910, %v917
        %v920 = vunpack.c.l.s4 1983009808
        %v921 = vunpack.c.0.s8 %v920
        %v922 = vlaneseq
        %v923 = vshrl.u32 %v922, 7
        %v924 = vsub.s32 %v921, %v923
        %v925 = vrot.slane %v911, %v924
        %v926 = vcombine.low %v903, %v905
        %v927 = vcombine.high %v903, %v905
        %v929 = vunpack.c.l.s4 1983009808
        %v930 = vunpack.c.0.s8 %v929
        %v931 = vlaneseq
        %v932 = vshrl.u32 %v931, 7
        %v933 = vsub.s32 %v930, %v932
        %v934 = vrot.slane %v926, %v933
        %v936 = vunpack.c.l.s4 1983009808
        %v937 = vunpack.c.0.s8 %v936
        %v938 = vlaneseq
        %v939 = vshrl.u32 %v938, 7
        %v940 = vsub.s32 %v937, %v939
        %v941 = vrot.slane %v927, %v940
        %v942 = vcombine.low %v906, %v908
        %v943 = vcombine.high %v906, %v908
        %v945 = vunpack.c.l.s4 1983009808
        %v946 = vunpack.c.0.s8 %v945
        %v947 = vlaneseq
        %v948 = vshrl.u32 %v947, 7
        %v949 = vsub.s32 %v946, %v948
        %v950 = vrot.slane %v942, %v949
        %v952 = vunpack.c.l.s4 1983009808
        %v953 = vunpack.c.0.s8 %v952
        %v954 = vlaneseq
        %v955 = vshrl.u32 %v954, 7
        %v956 = vsub.s32 %v953, %v955
        %v957 = vrot.slane %v943, %v956
        %v958 = vcombine.low %v907, %v909
        %v959 = vcombine.high %v907, %v909
        %v961 = vunpack.c.l.s4 1983009808
        %v962 = vunpack.c.0.s8 %v961
        %v963 = vlaneseq
        %v964 = vshrl.u32 %v963, 7
        %v965 = vsub.s32 %v962, %v964
        %v966 = vrot.slane %v958, %v965
        %v968 = vunpack.c.l.s4 1983009808
        %v969 = vunpack.c.0.s8 %v968
        %v970 = vlaneseq
        %v971 = vshrl.u32 %v970, 7
        %v972 = vsub.s32 %v969, %v971
        %v973 = vrot.slane %v959, %v972
        %v974 = vcombine.low %v918, %v934
        %v975 = vcombine.high %v918, %v934
        %v977 = vunpack.c.l.s4 1934713408
        %v978 = vunpack.c.0.s8 %v977
        %v979 = vlaneseq
        %v980 = vshrl.u32 %v979, 7
        %v981 = vsub.s32 %v978, %v980
        %v982 = vrot.slane %v974, %v981
        %v984 = vunpack.c.l.s4 1934713408
        %v985 = vunpack.c.0.s8 %v984
        %v986 = vlaneseq
        %v987 = vshrl.u32 %v986, 7
        %v988 = vsub.s32 %v985, %v987
        %v989 = vrot.slane %v975, %v988
        %v990 = vcombine.low %v925, %v941
        %v991 = vcombine.high %v925, %v941
        %v993 = vunpack.c.l.s4 1934713408
        %v994 = vunpack.c.0.s8 %v993
        %v995 = vlaneseq
        %v996 = vshrl.u32 %v995, 7
        %v997 = vsub.s32 %v994, %v996
        %v998 = vrot.slane %v990, %v997
        %v1000 = vunpack.c.l.s4 1934713408
        %v1001 = vunpack.c.0.s8 %v1000
        %v1002 = vlaneseq
        %v1003 = vshrl.u32 %v1002, 7
        %v1004 = vsub.s32 %v1001, %v1003
        %v1005 = vrot.slane %v991, %v1004
        %v1006 = vcombine.low %v950, %v966
        %v1007 = vcombine.high %v950, %v966
        %v1009 = vunpack.c.l.s4 1934713408
        %v1010 = vunpack.c.0.s8 %v1009
        %v1011 = vlaneseq
        %v1012 = vshrl.u32 %v1011, 7
        %v1013 = vsub.s32 %v1010, %v1012
        %v1014 = vrot.slane %v1006, %v1013
        %v1016 = vunpack.c.l.s4 1934713408
        %v1017 = vunpack.c.0.s8 %v1016
        %v1018 = vlaneseq
        %v1019 = vshrl.u32 %v1018, 7
        %v1020 = vsub.s32 %v1017, %v1019
        %v1021 = vrot.slane %v1007, %v1020
        %v1022 = vcombine.low %v957, %v973
        %v1023 = vcombine.high %v957, %v973
        %v1025 = vunpack.c.l.s4 1934713408
        %v1026 = vunpack.c.0.s8 %v1025
        %v1027 = vlaneseq
        %v1028 = vshrl.u32 %v1027, 7
        %v1029 = vsub.s32 %v1026, %v1028
        %v1030 = vrot.slane %v1022, %v1029
        %v1032 = vunpack.c.l.s4 1934713408
        %v1033 = vunpack.c.0.s8 %v1032
        %v1034 = vlaneseq
        %v1035 = vshrl.u32 %v1034, 7
        %v1036 = vsub.s32 %v1033, %v1035
        %v1037 = vrot.slane %v1023, %v1036
        %v1038 = vcombine.low %v982, %v1014
        %v1039 = vcombine.high %v982, %v1014
        %v1040 = vcombine.low %v989, %v1021
        %v1041 = vcombine.high %v989, %v1021
        %v1042 = vcombine.low %v998, %v1030
        %v1043 = vcombine.high %v998, %v1030
        %v1044 = vcombine.low %v1005, %v1037
        %v1045 = vcombine.high %v1005, %v1037
        %v1046 = vpack.c.bf16 %v1038, %v1038
        %v1047 = vpack.c.bf16 %v1039, %v1039
        %v1048 = vpack.c.bf16 %v1040, %v1040
        %v1049 = vpack.c.bf16 %v1041, %v1041
        %v1050 = vpack.c.bf16 %v1042, %v1042
        %v1051 = vpack.c.bf16 %v1043, %v1043
        %v1052 = vpack.c.bf16 %v1044, %v1044
        %v1053 = vpack.c.bf16 %v1045, %v1045
        %1055 = vrot.lane.b32.xlu0 %v445, 96
        %v1056 = vpop.permute.xlu0 %1055
        %1058 = vrot.lane.b32.xlu0 %v445, 64
        %v1059 = vpop.permute.xlu0 %1058
        %1061 = vrot.lane.b32.xlu0 %v445, 32
        %v1062 = vpop.permute.xlu0 %1061
        %v1064 = vcombine.low %v445, %v1059
        %v1065 = vcombine.high %v445, %v1059
        %v1067 = vunpack.c.l.s4 1983009808
        %v1068 = vunpack.c.0.s8 %v1067
        %v1069 = vlaneseq
        %v1070 = vshrl.u32 %v1069, 7
        %v1071 = vsub.s32 %v1068, %v1070
        %v1072 = vrot.slane %v1064, %v1071
        %v1074 = vunpack.c.l.s4 1983009808
        %v1075 = vunpack.c.0.s8 %v1074
        %v1076 = vlaneseq
        %v1077 = vshrl.u32 %v1076, 7
        %v1078 = vsub.s32 %v1075, %v1077
        %v1079 = vrot.slane %v1065, %v1078
        %v1080 = vcombine.low %v1056, %v1062
        %v1081 = vcombine.high %v1056, %v1062
        %v1083 = vunpack.c.l.s4 1983009808
        %v1084 = vunpack.c.0.s8 %v1083
        %v1085 = vlaneseq
        %v1086 = vshrl.u32 %v1085, 7
        %v1087 = vsub.s32 %v1084, %v1086
        %v1088 = vrot.slane %v1080, %v1087
        %v1090 = vunpack.c.l.s4 1983009808
        %v1091 = vunpack.c.0.s8 %v1090
        %v1092 = vlaneseq
        %v1093 = vshrl.u32 %v1092, 7
        %v1094 = vsub.s32 %v1091, %v1093
        %v1095 = vrot.slane %v1081, %v1094
        %v1096 = vcombine.low %v1072, %v1088
        %v1097 = vcombine.high %v1072, %v1088
        %v1099 = vunpack.c.l.s4 1934713408
        %v1100 = vunpack.c.0.s8 %v1099
        %v1101 = vlaneseq
        %v1102 = vshrl.u32 %v1101, 7
        %v1103 = vsub.s32 %v1100, %v1102
        %v1104 = vrot.slane %v1096, %v1103
        %v1106 = vunpack.c.l.s4 1934713408
        %v1107 = vunpack.c.0.s8 %v1106
        %v1108 = vlaneseq
        %v1109 = vshrl.u32 %v1108, 7
        %v1110 = vsub.s32 %v1107, %v1109
        %v1111 = vrot.slane %v1097, %v1110
        %v1112 = vcombine.low %v1079, %v1095
        %v1113 = vcombine.high %v1079, %v1095
        %v1115 = vunpack.c.l.s4 1934713408
        %v1116 = vunpack.c.0.s8 %v1115
        %v1117 = vlaneseq
        %v1118 = vshrl.u32 %v1117, 7
        %v1119 = vsub.s32 %v1116, %v1118
        %v1120 = vrot.slane %v1112, %v1119
        %v1122 = vunpack.c.l.s4 1934713408
        %v1123 = vunpack.c.0.s8 %v1122
        %v1124 = vlaneseq
        %v1125 = vshrl.u32 %v1124, 7
        %v1126 = vsub.s32 %v1123, %v1125
        %v1127 = vrot.slane %v1113, %v1126
        %v1128 = vcombine.high %v1104, 0.0
        %v1129 = vcombine.high %v1111, 0.0
        %v1130 = vcombine.high %v1120, 0.0
        %v1131 = vcombine.high %v1127, 0.0
        %v1132 = vcombine.low %v1104, %v1111
        %v1134 = vunpack.c.l.s4 1983009808
        %v1135 = vunpack.c.0.s8 %v1134
        %v1136 = vlaneseq
        %v1137 = vshrl.u32 %v1136, 7
        %v1138 = vsub.s32 %v1135, %v1137
        %v1139 = vrot.slane %v1132, %v1138
        %v1140 = vcombine.low %v1128, %v1129
        %v1142 = vunpack.c.l.s4 1983009808
        %v1143 = vunpack.c.0.s8 %v1142
        %v1144 = vlaneseq
        %v1145 = vshrl.u32 %v1144, 7
        %v1146 = vsub.s32 %v1143, %v1145
        %v1147 = vrot.slane %v1140, %v1146
        %v1148 = vcombine.low %v1120, %v1127
        %v1150 = vunpack.c.l.s4 1983009808
        %v1151 = vunpack.c.0.s8 %v1150
        %v1152 = vlaneseq
        %v1153 = vshrl.u32 %v1152, 7
        %v1154 = vsub.s32 %v1151, %v1153
        %v1155 = vrot.slane %v1148, %v1154
        %v1156 = vcombine.low %v1130, %v1131
        %v1158 = vunpack.c.l.s4 1983009808
        %v1159 = vunpack.c.0.s8 %v1158
        %v1160 = vlaneseq
        %v1161 = vshrl.u32 %v1160, 7
        %v1162 = vsub.s32 %v1159, %v1161
        %v1163 = vrot.slane %v1156, %v1162
        %v1164 = vcombine.low %v1139, %v1147
        %v1165 = vcombine.high %v1139, %v1147
        %v1167 = vunpack.c.l.s4 1934713408
        %v1168 = vunpack.c.0.s8 %v1167
        %v1169 = vlaneseq
        %v1170 = vshrl.u32 %v1169, 7
        %v1171 = vsub.s32 %v1168, %v1170
        %v1172 = vrot.slane %v1164, %v1171
        %v1174 = vunpack.c.l.s4 1934713408
        %v1175 = vunpack.c.0.s8 %v1174
        %v1176 = vlaneseq
        %v1177 = vshrl.u32 %v1176, 7
        %v1178 = vsub.s32 %v1175, %v1177
        %v1179 = vrot.slane %v1165, %v1178
        %v1180 = vcombine.low %v1155, %v1163
        %v1181 = vcombine.high %v1155, %v1163
        %v1183 = vunpack.c.l.s4 1934713408
        %v1184 = vunpack.c.0.s8 %v1183
        %v1185 = vlaneseq
        %v1186 = vshrl.u32 %v1185, 7
        %v1187 = vsub.s32 %v1184, %v1186
        %v1188 = vrot.slane %v1180, %v1187
        %v1190 = vunpack.c.l.s4 1934713408
        %v1191 = vunpack.c.0.s8 %v1190
        %v1192 = vlaneseq
        %v1193 = vshrl.u32 %v1192, 7
        %v1194 = vsub.s32 %v1191, %v1193
        %v1195 = vrot.slane %v1181, %v1194
        %v1196 = vcombine.low %v1172, %v1188
        %v1197 = vcombine.high %v1172, %v1188
        %v1198 = vcombine.low %v1179, %v1195
        %v1199 = vcombine.high %v1179, %v1195
        %v1200 = vpack.c.bf16 %v1196, %v1196
        %v1201 = vpack.c.bf16 %v1197, %v1197
        %v1202 = vpack.c.bf16 %v1198, %v1198
        %v1203 = vpack.c.bf16 %v1199, %v1199
        %vm1204 = vcmask 130048
        %v1206 = vsel %vm1204, %v744, 0
        %v1209 = vsel %vm1204, %v1046, 0
        %1211 = vmatprep.subr.bf16.mxu0 0
        %1212 = vmatpush1.bf16.xpose.msra.mxu0 %v1209
        %1213 = vmatprep.subr.bf16.mxu0 0
        %1214 = vmatpush1.bf16.xpose.msra.mxu0 0
        %1215 = vmatprep.subr.bf16.mxu0 0
        %1216 = vmatpush1.bf16.xpose.msra.mxu0 0
        %1217 = vmatprep.subr.bf16.mxu0 0
        %1218 = vmatpush1.bf16.xpose.msra.mxu0 0
        %1219 = vmatprep.subr.bf16.mxu0 0
        %1220 = vmatpush1.bf16.xpose.msra.mxu0 0
        %1221 = vmatprep.subr.bf16.mxu0 0
        %1222 = vmatpush1.bf16.xpose.msra.mxu0 0
        %1223 = vmatprep.subr.bf16.mxu0 0
        %1224 = vmatpush1.bf16.xpose.msra.mxu0 0
        %1225 = vmatprep.subr.bf16.mxu0 0
        %1226 = vmatpush1.bf16.xpose.msra.mxu0 0
        %1227 = vmatprep.subr.bf16.mxu0 0
        %1228 = vmatpush1.bf16.xpose.msra.mxu0 0
        %1229 = vmatprep.subr.bf16.mxu0 0
        %1230 = vmatpush1.bf16.xpose.msra.mxu0 0
        %1231 = vmatprep.subr.bf16.mxu0 0
        %1232 = vmatpush1.bf16.xpose.msra.mxu0 0
        %1233 = vmatprep.subr.bf16.mxu0 0
        %1234 = vmatpush1.bf16.xpose.msra.mxu0 0
        %1235 = vmatprep.subr.bf16.mxu0 0
        %1236 = vmatpush1.bf16.xpose.msra.mxu0 0
        %1237 = vmatprep.subr.bf16.mxu0 0
        %1238 = vmatpush1.bf16.xpose.msra.mxu0 0
        %1239 = vmatprep.subr.bf16.mxu0 0
        %1240 = vmatpush1.bf16.xpose.msra.mxu0 0
        %1241 = vmatprep.subr.bf16.mxu0 0
        %1242 = vmatpush1.bf16.xpose.msra.mxu0 0
        %1243 = vmatprep.mubr.bf16.mxu0 0
        %1244 = vmatmul.mubr.bf16.gmra.mrb[0].mxu0 %v1206
        %v1245 = vpop.f32.mrb[0].mxu0
        %v1246 = vadd.f32 0.0, %v1245
        %v1247 = vpop.f32.mrb[0].mxu0
        %v1248 = vpop.f32.mrb[0].mxu0
        %v1249 = vpop.f32.mrb[0].mxu0
        %1250 = vdwg.mxu0
        %v1252 = vsel %vm1204, %v745, 0
        %v1255 = vsel %vm1204, %v1047, 0
        %1257 = vmatprep.subr.bf16.mxu0 0
        %1258 = vmatpush1.bf16.xpose.msra.mxu0 %v1255
        %1259 = vmatprep.subr.bf16.mxu0 0
        %1260 = vmatpush1.bf16.xpose.msra.mxu0 0
        %1261 = vmatprep.subr.bf16.mxu0 0
        %1262 = vmatpush1.bf16.xpose.msra.mxu0 0
        %1263 = vmatprep.subr.bf16.mxu0 0
        %1264 = vmatpush1.bf16.xpose.msra.mxu0 0
        %1265 = vmatprep.subr.bf16.mxu0 0
        %1266 = vmatpush1.bf16.xpose.msra.mxu0 0
        %1267 = vmatprep.subr.bf16.mxu0 0
        %1268 = vmatpush1.bf16.xpose.msra.mxu0 0
        %1269 = vmatprep.subr.bf16.mxu0 0
        %1270 = vmatpush1.bf16.xpose.msra.mxu0 0
        %1271 = vmatprep.subr.bf16.mxu0 0
        %1272 = vmatpush1.bf16.xpose.msra.mxu0 0
        %1273 = vmatprep.subr.bf16.mxu0 0
        %1274 = vmatpush1.bf16.xpose.msra.mxu0 0
        %1275 = vmatprep.subr.bf16.mxu0 0
        %1276 = vmatpush1.bf16.xpose.msra.mxu0 0
        %1277 = vmatprep.subr.bf16.mxu0 0
        %1278 = vmatpush1.bf16.xpose.msra.mxu0 0
        %1279 = vmatprep.subr.bf16.mxu0 0
        %1280 = vmatpush1.bf16.xpose.msra.mxu0 0
        %1281 = vmatprep.subr.bf16.mxu0 0
        %1282 = vmatpush1.bf16.xpose.msra.mxu0 0
        %1283 = vmatprep.subr.bf16.mxu0 0
        %1284 = vmatpush1.bf16.xpose.msra.mxu0 0
        %1285 = vmatprep.subr.bf16.mxu0 0
        %1286 = vmatpush1.bf16.xpose.msra.mxu0 0
        %1287 = vmatprep.subr.bf16.mxu0 0
        %1288 = vmatpush1.bf16.xpose.msra.mxu0 0
        %1289 = vmatprep.mubr.bf16.mxu0 0
        %1290 = vmatmul.mubr.bf16.gmra.mrb[0].mxu0 %v1252
        %v1291 = vpop.f32.mrb[0].mxu0
        %v1292 = vadd.f32 0.0, %v1291
        %v1293 = vpop.f32.mrb[0].mxu0
        %v1294 = vpop.f32.mrb[0].mxu0
        %v1295 = vpop.f32.mrb[0].mxu0
        %1296 = vdwg.mxu0
        %v1298 = vsel %vm1204, %v746, 0
        %v1301 = vsel %vm1204, %v1048, 0
        %1303 = vmatprep.subr.bf16.mxu0 0
        %1304 = vmatpush1.bf16.xpose.msra.mxu0 %v1301
        %1305 = vmatprep.subr.bf16.mxu0 0
        %1306 = vmatpush1.bf16.xpose.msra.mxu0 0
        %1307 = vmatprep.subr.bf16.mxu0 0
        %1308 = vmatpush1.bf16.xpose.msra.mxu0 0
        %1309 = vmatprep.subr.bf16.mxu0 0
        %1310 = vmatpush1.bf16.xpose.msra.mxu0 0
        %1311 = vmatprep.subr.bf16.mxu0 0
        %1312 = vmatpush1.bf16.xpose.msra.mxu0 0
        %1313 = vmatprep.subr.bf16.mxu0 0
        %1314 = vmatpush1.bf16.xpose.msra.mxu0 0
        %1315 = vmatprep.subr.bf16.mxu0 0
        %1316 = vmatpush1.bf16.xpose.msra.mxu0 0
        %1317 = vmatprep.subr.bf16.mxu0 0
        %1318 = vmatpush1.bf16.xpose.msra.mxu0 0
        %1319 = vmatprep.subr.bf16.mxu0 0
        %1320 = vmatpush1.bf16.xpose.msra.mxu0 0
        %1321 = vmatprep.subr.bf16.mxu0 0
        %1322 = vmatpush1.bf16.xpose.msra.mxu0 0
        %1323 = vmatprep.subr.bf16.mxu0 0
        %1324 = vmatpush1.bf16.xpose.msra.mxu0 0
        %1325 = vmatprep.subr.bf16.mxu0 0
        %1326 = vmatpush1.bf16.xpose.msra.mxu0 0
        %1327 = vmatprep.subr.bf16.mxu0 0
        %1328 = vmatpush1.bf16.xpose.msra.mxu0 0
        %1329 = vmatprep.subr.bf16.mxu0 0
        %1330 = vmatpush1.bf16.xpose.msra.mxu0 0
        %1331 = vmatprep.subr.bf16.mxu0 0
        %1332 = vmatpush1.bf16.xpose.msra.mxu0 0
        %1333 = vmatprep.subr.bf16.mxu0 0
        %1334 = vmatpush1.bf16.xpose.msra.mxu0 0
        %1335 = vmatprep.mubr.bf16.mxu0 0
        %1336 = vmatmul.mubr.bf16.gmra.mrb[0].mxu0 %v1298
        %v1337 = vpop.f32.mrb[0].mxu0
        %v1338 = vadd.f32 0.0, %v1337
        %v1339 = vpop.f32.mrb[0].mxu0
        %v1340 = vpop.f32.mrb[0].mxu0
        %v1341 = vpop.f32.mrb[0].mxu0
        %1342 = vdwg.mxu0
        %v1344 = vsel %vm1204, %v747, 0
        %v1347 = vsel %vm1204, %v1049, 0
        %1349 = vmatprep.subr.bf16.mxu0 0
        %1350 = vmatpush1.bf16.xpose.msra.mxu0 %v1347
        %1351 = vmatprep.subr.bf16.mxu0 0
        %1352 = vmatpush1.bf16.xpose.msra.mxu0 0
        %1353 = vmatprep.subr.bf16.mxu0 0
        %1354 = vmatpush1.bf16.xpose.msra.mxu0 0
        %1355 = vmatprep.subr.bf16.mxu0 0
        %1356 = vmatpush1.bf16.xpose.msra.mxu0 0
        %1357 = vmatprep.subr.bf16.mxu0 0
        %1358 = vmatpush1.bf16.xpose.msra.mxu0 0
        %1359 = vmatprep.subr.bf16.mxu0 0
        %1360 = vmatpush1.bf16.xpose.msra.mxu0 0
        %1361 = vmatprep.subr.bf16.mxu0 0
        %1362 = vmatpush1.bf16.xpose.msra.mxu0 0
        %1363 = vmatprep.subr.bf16.mxu0 0
        %1364 = vmatpush1.bf16.xpose.msra.mxu0 0
        %1365 = vmatprep.subr.bf16.mxu0 0
        %1366 = vmatpush1.bf16.xpose.msra.mxu0 0
        %1367 = vmatprep.subr.bf16.mxu0 0
        %1368 = vmatpush1.bf16.xpose.msra.mxu0 0
        %1369 = vmatprep.subr.bf16.mxu0 0
        %1370 = vmatpush1.bf16.xpose.msra.mxu0 0
        %1371 = vmatprep.subr.bf16.mxu0 0
        %1372 = vmatpush1.bf16.xpose.msra.mxu0 0
        %1373 = vmatprep.subr.bf16.mxu0 0
        %1374 = vmatpush1.bf16.xpose.msra.mxu0 0
        %1375 = vmatprep.subr.bf16.mxu0 0
        %1376 = vmatpush1.bf16.xpose.msra.mxu0 0
        %1377 = vmatprep.subr.bf16.mxu0 0
        %1378 = vmatpush1.bf16.xpose.msra.mxu0 0
        %1379 = vmatprep.subr.bf16.mxu0 0
        %1380 = vmatpush1.bf16.xpose.msra.mxu0 0
        %1381 = vmatprep.mubr.bf16.mxu0 0
        %1382 = vmatmul.mubr.bf16.gmra.mrb[0].mxu0 %v1344
        %v1383 = vpop.f32.mrb[0].mxu0
        %v1384 = vadd.f32 0.0, %v1383
        %v1385 = vpop.f32.mrb[0].mxu0
        %v1386 = vpop.f32.mrb[0].mxu0
        %v1387 = vpop.f32.mrb[0].mxu0
        %1388 = vdwg.mxu0
        %v1390 = vsel %vm1204, %v748, 0
        %v1393 = vsel %vm1204, %v1050, 0
        %1395 = vmatprep.subr.bf16.mxu0 0
        %1396 = vmatpush1.bf16.xpose.msra.mxu0 %v1393
        %1397 = vmatprep.subr.bf16.mxu0 0
        %1398 = vmatpush1.bf16.xpose.msra.mxu0 0
        %1399 = vmatprep.subr.bf16.mxu0 0
        %1400 = vmatpush1.bf16.xpose.msra.mxu0 0
        %1401 = vmatprep.subr.bf16.mxu0 0
        %1402 = vmatpush1.bf16.xpose.msra.mxu0 0
        %1403 = vmatprep.subr.bf16.mxu0 0
        %1404 = vmatpush1.bf16.xpose.msra.mxu0 0
        %1405 = vmatprep.subr.bf16.mxu0 0
        %1406 = vmatpush1.bf16.xpose.msra.mxu0 0
        %1407 = vmatprep.subr.bf16.mxu0 0
        %1408 = vmatpush1.bf16.xpose.msra.mxu0 0
        %1409 = vmatprep.subr.bf16.mxu0 0
        %1410 = vmatpush1.bf16.xpose.msra.mxu0 0
        %1411 = vmatprep.subr.bf16.mxu0 0
        %1412 = vmatpush1.bf16.xpose.msra.mxu0 0
        %1413 = vmatprep.subr.bf16.mxu0 0
        %1414 = vmatpush1.bf16.xpose.msra.mxu0 0
        %1415 = vmatprep.subr.bf16.mxu0 0
        %1416 = vmatpush1.bf16.xpose.msra.mxu0 0
        %1417 = vmatprep.subr.bf16.mxu0 0
        %1418 = vmatpush1.bf16.xpose.msra.mxu0 0
        %1419 = vmatprep.subr.bf16.mxu0 0
        %1420 = vmatpush1.bf16.xpose.msra.mxu0 0
        %1421 = vmatprep.subr.bf16.mxu0 0
        %1422 = vmatpush1.bf16.xpose.msra.mxu0 0
        %1423 = vmatprep.subr.bf16.mxu0 0
        %1424 = vmatpush1.bf16.xpose.msra.mxu0 0
        %1425 = vmatprep.subr.bf16.mxu0 0
        %1426 = vmatpush1.bf16.xpose.msra.mxu0 0
        %1427 = vmatprep.mubr.bf16.mxu0 0
        %1428 = vmatmul.mubr.bf16.gmra.mrb[0].mxu0 %v1390
        %v1429 = vpop.f32.mrb[0].mxu0
        %v1430 = vadd.f32 0.0, %v1429
        %v1431 = vpop.f32.mrb[0].mxu0
        %v1432 = vpop.f32.mrb[0].mxu0
        %v1433 = vpop.f32.mrb[0].mxu0
        %1434 = vdwg.mxu0
        %v1436 = vsel %vm1204, %v749, 0
        %v1439 = vsel %vm1204, %v1051, 0
        %1441 = vmatprep.subr.bf16.mxu0 0
        %1442 = vmatpush1.bf16.xpose.msra.mxu0 %v1439
        %1443 = vmatprep.subr.bf16.mxu0 0
        %1444 = vmatpush1.bf16.xpose.msra.mxu0 0
        %1445 = vmatprep.subr.bf16.mxu0 0
        %1446 = vmatpush1.bf16.xpose.msra.mxu0 0
        %1447 = vmatprep.subr.bf16.mxu0 0
        %1448 = vmatpush1.bf16.xpose.msra.mxu0 0
        %1449 = vmatprep.subr.bf16.mxu0 0
        %1450 = vmatpush1.bf16.xpose.msra.mxu0 0
        %1451 = vmatprep.subr.bf16.mxu0 0
        %1452 = vmatpush1.bf16.xpose.msra.mxu0 0
        %1453 = vmatprep.subr.bf16.mxu0 0
        %1454 = vmatpush1.bf16.xpose.msra.mxu0 0
        %1455 = vmatprep.subr.bf16.mxu0 0
        %1456 = vmatpush1.bf16.xpose.msra.mxu0 0
        %1457 = vmatprep.subr.bf16.mxu0 0
        %1458 = vmatpush1.bf16.xpose.msra.mxu0 0
        %1459 = vmatprep.subr.bf16.mxu0 0
        %1460 = vmatpush1.bf16.xpose.msra.mxu0 0
        %1461 = vmatprep.subr.bf16.mxu0 0
        %1462 = vmatpush1.bf16.xpose.msra.mxu0 0
        %1463 = vmatprep.subr.bf16.mxu0 0
        %1464 = vmatpush1.bf16.xpose.msra.mxu0 0
        %1465 = vmatprep.subr.bf16.mxu0 0
        %1466 = vmatpush1.bf16.xpose.msra.mxu0 0
        %1467 = vmatprep.subr.bf16.mxu0 0
        %1468 = vmatpush1.bf16.xpose.msra.mxu0 0
        %1469 = vmatprep.subr.bf16.mxu0 0
        %1470 = vmatpush1.bf16.xpose.msra.mxu0 0
        %1471 = vmatprep.subr.bf16.mxu0 0
        %1472 = vmatpush1.bf16.xpose.msra.mxu0 0
        %1473 = vmatprep.mubr.bf16.mxu0 0
        %1474 = vmatmul.mubr.bf16.gmra.mrb[0].mxu0 %v1436
        %v1475 = vpop.f32.mrb[0].mxu0
        %v1476 = vadd.f32 0.0, %v1475
        %v1477 = vpop.f32.mrb[0].mxu0
        %v1478 = vpop.f32.mrb[0].mxu0
        %v1479 = vpop.f32.mrb[0].mxu0
        %1480 = vdwg.mxu0
        %v1482 = vsel %vm1204, %v750, 0
        %v1485 = vsel %vm1204, %v1052, 0
        %1487 = vmatprep.subr.bf16.mxu0 0
        %1488 = vmatpush1.bf16.xpose.msra.mxu0 %v1485
        %1489 = vmatprep.subr.bf16.mxu0 0
        %1490 = vmatpush1.bf16.xpose.msra.mxu0 0
        %1491 = vmatprep.subr.bf16.mxu0 0
        %1492 = vmatpush1.bf16.xpose.msra.mxu0 0
        %1493 = vmatprep.subr.bf16.mxu0 0
        %1494 = vmatpush1.bf16.xpose.msra.mxu0 0
        %1495 = vmatprep.subr.bf16.mxu0 0
        %1496 = vmatpush1.bf16.xpose.msra.mxu0 0
        %1497 = vmatprep.subr.bf16.mxu0 0
        %1498 = vmatpush1.bf16.xpose.msra.mxu0 0
        %1499 = vmatprep.subr.bf16.mxu0 0
        %1500 = vmatpush1.bf16.xpose.msra.mxu0 0
        %1501 = vmatprep.subr.bf16.mxu0 0
        %1502 = vmatpush1.bf16.xpose.msra.mxu0 0
        %1503 = vmatprep.subr.bf16.mxu0 0
        %1504 = vmatpush1.bf16.xpose.msra.mxu0 0
        %1505 = vmatprep.subr.bf16.mxu0 0
        %1506 = vmatpush1.bf16.xpose.msra.mxu0 0
        %1507 = vmatprep.subr.bf16.mxu0 0
        %1508 = vmatpush1.bf16.xpose.msra.mxu0 0
        %1509 = vmatprep.subr.bf16.mxu0 0
        %1510 = vmatpush1.bf16.xpose.msra.mxu0 0
        %1511 = vmatprep.subr.bf16.mxu0 0
        %1512 = vmatpush1.bf16.xpose.msra.mxu0 0
        %1513 = vmatprep.subr.bf16.mxu0 0
        %1514 = vmatpush1.bf16.xpose.msra.mxu0 0
        %1515 = vmatprep.subr.bf16.mxu0 0
        %1516 = vmatpush1.bf16.xpose.msra.mxu0 0
        %1517 = vmatprep.subr.bf16.mxu0 0
        %1518 = vmatpush1.bf16.xpose.msra.mxu0 0
        %1519 = vmatprep.mubr.bf16.mxu0 0
        %1520 = vmatmul.mubr.bf16.gmra.mrb[0].mxu0 %v1482
        %v1521 = vpop.f32.mrb[0].mxu0
        %v1522 = vadd.f32 0.0, %v1521
        %v1523 = vpop.f32.mrb[0].mxu0
        %v1524 = vpop.f32.mrb[0].mxu0
        %v1525 = vpop.f32.mrb[0].mxu0
        %1526 = vdwg.mxu0
        %v1528 = vsel %vm1204, %v751, 0
        %v1531 = vsel %vm1204, %v1053, 0
        %1533 = vmatprep.subr.bf16.mxu0 0
        %1534 = vmatpush1.bf16.xpose.msra.mxu0 %v1531
        %1535 = vmatprep.subr.bf16.mxu0 0
        %1536 = vmatpush1.bf16.xpose.msra.mxu0 0
        %1537 = vmatprep.subr.bf16.mxu0 0
        %1538 = vmatpush1.bf16.xpose.msra.mxu0 0
        %1539 = vmatprep.subr.bf16.mxu0 0
        %1540 = vmatpush1.bf16.xpose.msra.mxu0 0
        %1541 = vmatprep.subr.bf16.mxu0 0
        %1542 = vmatpush1.bf16.xpose.msra.mxu0 0
        %1543 = vmatprep.subr.bf16.mxu0 0
        %1544 = vmatpush1.bf16.xpose.msra.mxu0 0
        %1545 = vmatprep.subr.bf16.mxu0 0
        %1546 = vmatpush1.bf16.xpose.msra.mxu0 0
        %1547 = vmatprep.subr.bf16.mxu0 0
        %1548 = vmatpush1.bf16.xpose.msra.mxu0 0
        %1549 = vmatprep.subr.bf16.mxu0 0
        %1550 = vmatpush1.bf16.xpose.msra.mxu0 0
        %1551 = vmatprep.subr.bf16.mxu0 0
        %1552 = vmatpush1.bf16.xpose.msra.mxu0 0
        %1553 = vmatprep.subr.bf16.mxu0 0
        %1554 = vmatpush1.bf16.xpose.msra.mxu0 0
        %1555 = vmatprep.subr.bf16.mxu0 0
        %1556 = vmatpush1.bf16.xpose.msra.mxu0 0
        %1557 = vmatprep.subr.bf16.mxu0 0
        %1558 = vmatpush1.bf16.xpose.msra.mxu0 0
        %1559 = vmatprep.subr.bf16.mxu0 0
        %1560 = vmatpush1.bf16.xpose.msra.mxu0 0
        %1561 = vmatprep.subr.bf16.mxu0 0
        %1562 = vmatpush1.bf16.xpose.msra.mxu0 0
        %1563 = vmatprep.subr.bf16.mxu0 0
        %1564 = vmatpush1.bf16.xpose.msra.mxu0 0
        %1565 = vmatprep.mubr.bf16.mxu0 0
        %1566 = vmatmul.mubr.bf16.gmra.mrb[0].mxu0 %v1528
        %v1567 = vpop.f32.mrb[0].mxu0
        %v1568 = vadd.f32 0.0, %v1567
        %v1569 = vpop.f32.mrb[0].mxu0
        %v1570 = vpop.f32.mrb[0].mxu0
        %v1571 = vpop.f32.mrb[0].mxu0
        %1572 = vdwg.mxu0
        %vm1573 = vcmask 64512
        %v1574 = vsel %vm1573, %v1246, -inf
        %1575 = vmax.xlane.f32.xlu0 %v1574
        %v1576 = vpop.xlane.xlu0 %1575
        %v1577 = vsel %vm1573, %v1292, -inf
        %1578 = vmax.xlane.f32.xlu0 %v1577
        %v1579 = vpop.xlane.xlu0 %1578
        %v1580 = vsel %vm1573, %v1338, -inf
        %1581 = vmax.xlane.f32.xlu0 %v1580
        %v1582 = vpop.xlane.xlu0 %1581
        %v1583 = vsel %vm1573, %v1384, -inf
        %1584 = vmax.xlane.f32.xlu0 %v1583
        %v1585 = vpop.xlane.xlu0 %1584
        %v1586 = vsel %vm1573, %v1430, -inf
        %1587 = vmax.xlane.f32.xlu0 %v1586
        %v1588 = vpop.xlane.xlu0 %1587
        %v1589 = vsel %vm1573, %v1476, -inf
        %1590 = vmax.xlane.f32.xlu0 %v1589
        %v1591 = vpop.xlane.xlu0 %1590
        %v1592 = vsel %vm1573, %v1522, -inf
        %1593 = vmax.xlane.f32.xlu0 %v1592
        %v1594 = vpop.xlane.xlu0 %1593
        %v1595 = vsel %vm1573, %v1568, -inf
        %1596 = vmax.xlane.f32.xlu0 %v1595
        %v1597 = vpop.xlane.xlu0 %1596
        %v1598 = vsub.f32 %v1246, %v1576
        %v1599 = vsub.f32 %v1292, %v1579
        %v1600 = vsub.f32 %v1338, %v1582
        %v1601 = vsub.f32 %v1384, %v1585
        %v1602 = vsub.f32 %v1430, %v1588
        %v1603 = vsub.f32 %v1476, %v1591
        %v1604 = vsub.f32 %v1522, %v1594
        %v1605 = vsub.f32 %v1568, %v1597
        %v1606 = vmul.f32 %v1598, 1.442695
        %v1607 = vpow.pop %v1606
        %v1608 = vmul.f32 %v1599, 1.442695
        %v1609 = vpow.pop %v1608
        %v1610 = vmul.f32 %v1600, 1.442695
        %v1611 = vpow.pop %v1610
        %v1612 = vmul.f32 %v1601, 1.442695
        %v1613 = vpow.pop %v1612
        %v1614 = vmul.f32 %v1602, 1.442695
        %v1615 = vpow.pop %v1614
        %v1616 = vmul.f32 %v1603, 1.442695
        %v1617 = vpow.pop %v1616
        %v1618 = vmul.f32 %v1604, 1.442695
        %v1619 = vpow.pop %v1618
        %v1620 = vmul.f32 %v1605, 1.442695
        %v1621 = vpow.pop %v1620
        %v1622 = vsel %vm1573, %v1607, 0.0
        %1623 = vadd.xlane.f32.xlu0 %v1622
        %v1624 = vpop.xlane.xlu0 %1623
        %v1625 = vsel %vm1573, %v1609, 0.0
        %1626 = vadd.xlane.f32.xlu0 %v1625
        %v1627 = vpop.xlane.xlu0 %1626
        %v1628 = vsel %vm1573, %v1611, 0.0
        %1629 = vadd.xlane.f32.xlu0 %v1628
        %v1630 = vpop.xlane.xlu0 %1629
        %v1631 = vsel %vm1573, %v1613, 0.0
        %1632 = vadd.xlane.f32.xlu0 %v1631
        %v1633 = vpop.xlane.xlu0 %1632
        %v1634 = vsel %vm1573, %v1615, 0.0
        %1635 = vadd.xlane.f32.xlu0 %v1634
        %v1636 = vpop.xlane.xlu0 %1635
        %v1637 = vsel %vm1573, %v1617, 0.0
        %1638 = vadd.xlane.f32.xlu0 %v1637
        %v1639 = vpop.xlane.xlu0 %1638
        %v1640 = vsel %vm1573, %v1619, 0.0
        %1641 = vadd.xlane.f32.xlu0 %v1640
        %v1642 = vpop.xlane.xlu0 %1641
        %v1643 = vsel %vm1573, %v1621, 0.0
        %1644 = vadd.xlane.f32.xlu0 %v1643
        %v1645 = vpop.xlane.xlu0 %1644
        %v1646 = vrcp.pop %v1624
        %v1647 = vmul.f32 %v1607, %v1646
        %v1648 = vrcp.pop %v1627
        %v1649 = vmul.f32 %v1609, %v1648
        %v1650 = vrcp.pop %v1630
        %v1651 = vmul.f32 %v1611, %v1650
        %v1652 = vrcp.pop %v1633
        %v1653 = vmul.f32 %v1613, %v1652
        %v1654 = vrcp.pop %v1636
        %v1655 = vmul.f32 %v1615, %v1654
        %v1656 = vrcp.pop %v1639
        %v1657 = vmul.f32 %v1617, %v1656
        %v1658 = vrcp.pop %v1642
        %v1659 = vmul.f32 %v1619, %v1658
        %v1660 = vrcp.pop %v1645
        %v1661 = vmul.f32 %v1621, %v1660
        %v1662 = vstv %s318
        %v1663 = vmul.f32 %v1662, %v1649
        %v1664 = vmul.f32 %v1662, %v1653
        %v1665 = vmul.f32 %v1662, %v1657
        %v1666 = vmul.f32 %v1662, %v1661
        %v1667 = vsub.f32 %v1647, %v1663
        %v1668 = vsub.f32 %v1651, %v1664
        %v1669 = vsub.f32 %v1655, %v1665
        %v1670 = vsub.f32 %v1659, %v1666
        %v1671 = vpack.c.bf16 %v1667, %v1667
        %v1672 = vpack.c.bf16 %v1668, %v1668
        %v1673 = vpack.c.bf16 %v1669, %v1669
        %v1674 = vpack.c.bf16 %v1670, %v1670
        %v1676 = vsel %vm1573, %v1671, 0
        %vm1678 = vcmask 1043456
        %v1680 = vsel %vm1678, %v1200, 0
        %1682 = vmatprep.subr.bf16.mxu0 0
        %1683 = vmatpush1.bf16.msra.mxu0 %v1680
        %1684 = vmatprep.subr.bf16.mxu0 0
        %1685 = vmatpush1.bf16.msra.mxu0 0
        %1686 = vmatprep.subr.bf16.mxu0 0
        %1687 = vmatpush1.bf16.msra.mxu0 0
        %1688 = vmatprep.subr.bf16.mxu0 0
        %1689 = vmatpush1.bf16.msra.mxu0 0
        %1690 = vmatprep.subr.bf16.mxu0 0
        %1691 = vmatpush1.bf16.msra.mxu0 0
        %1692 = vmatprep.subr.bf16.mxu0 0
        %1693 = vmatpush1.bf16.msra.mxu0 0
        %1694 = vmatprep.subr.bf16.mxu0 0
        %1695 = vmatpush1.bf16.msra.mxu0 0
        %1696 = vmatprep.subr.bf16.mxu0 0
        %1697 = vmatpush1.bf16.msra.mxu0 0
        %1698 = vmatprep.subr.bf16.mxu0 0
        %1699 = vmatpush1.bf16.msra.mxu0 0
        %1700 = vmatprep.subr.bf16.mxu0 0
        %1701 = vmatpush1.bf16.msra.mxu0 0
        %1702 = vmatprep.subr.bf16.mxu0 0
        %1703 = vmatpush1.bf16.msra.mxu0 0
        %1704 = vmatprep.subr.bf16.mxu0 0
        %1705 = vmatpush1.bf16.msra.mxu0 0
        %1706 = vmatprep.subr.bf16.mxu0 0
        %1707 = vmatpush1.bf16.msra.mxu0 0
        %1708 = vmatprep.subr.bf16.mxu0 0
        %1709 = vmatpush1.bf16.msra.mxu0 0
        %1710 = vmatprep.subr.bf16.mxu0 0
        %1711 = vmatpush1.bf16.msra.mxu0 0
        %1712 = vmatprep.subr.bf16.mxu0 0
        %1713 = vmatpush1.bf16.msra.mxu0 0
        %1714 = vmatprep.mubr.bf16.mxu0 0
        %1715 = vmatmul.mubr.bf16.gmra.mrb[0].mxu0 %v1676
        %v1716 = vpop.f32.mrb[0].mxu0
        %v1717 = vadd.f32 0.0, %v1716
        %v1718 = vpop.f32.mrb[0].mxu0
        %v1719 = vpop.f32.mrb[0].mxu0
        %v1720 = vpop.f32.mrb[0].mxu0
        %1721 = vdwg.mxu0
        %v1723 = vsel %vm1573, %v1672, 0
        %v1726 = vsel %vm1678, %v1201, 0
        %1728 = vmatprep.subr.bf16.mxu0 0
        %1729 = vmatpush1.bf16.msra.mxu0 %v1726
        %1730 = vmatprep.subr.bf16.mxu0 0
        %1731 = vmatpush1.bf16.msra.mxu0 0
        %1732 = vmatprep.subr.bf16.mxu0 0
        %1733 = vmatpush1.bf16.msra.mxu0 0
        %1734 = vmatprep.subr.bf16.mxu0 0
        %1735 = vmatpush1.bf16.msra.mxu0 0
        %1736 = vmatprep.subr.bf16.mxu0 0
        %1737 = vmatpush1.bf16.msra.mxu0 0
        %1738 = vmatprep.subr.bf16.mxu0 0
        %1739 = vmatpush1.bf16.msra.mxu0 0
        %1740 = vmatprep.subr.bf16.mxu0 0
        %1741 = vmatpush1.bf16.msra.mxu0 0
        %1742 = vmatprep.subr.bf16.mxu0 0
        %1743 = vmatpush1.bf16.msra.mxu0 0
        %1744 = vmatprep.subr.bf16.mxu0 0
        %1745 = vmatpush1.bf16.msra.mxu0 0
        %1746 = vmatprep.subr.bf16.mxu0 0
        %1747 = vmatpush1.bf16.msra.mxu0 0
        %1748 = vmatprep.subr.bf16.mxu0 0
        %1749 = vmatpush1.bf16.msra.mxu0 0
        %1750 = vmatprep.subr.bf16.mxu0 0
        %1751 = vmatpush1.bf16.msra.mxu0 0
        %1752 = vmatprep.subr.bf16.mxu0 0
        %1753 = vmatpush1.bf16.msra.mxu0 0
        %1754 = vmatprep.subr.bf16.mxu0 0
        %1755 = vmatpush1.bf16.msra.mxu0 0
        %1756 = vmatprep.subr.bf16.mxu0 0
        %1757 = vmatpush1.bf16.msra.mxu0 0
        %1758 = vmatprep.subr.bf16.mxu0 0
        %1759 = vmatpush1.bf16.msra.mxu0 0
        %1760 = vmatprep.mubr.bf16.mxu0 0
        %1761 = vmatmul.mubr.bf16.gmra.mrb[0].mxu0 %v1723
        %v1762 = vpop.f32.mrb[0].mxu0
        %v1763 = vadd.f32 0.0, %v1762
        %v1764 = vpop.f32.mrb[0].mxu0
        %v1765 = vpop.f32.mrb[0].mxu0
        %v1766 = vpop.f32.mrb[0].mxu0
        %1767 = vdwg.mxu0
        %v1769 = vsel %vm1573, %v1673, 0
        %v1772 = vsel %vm1678, %v1202, 0
        %1774 = vmatprep.subr.bf16.mxu0 0
        %1775 = vmatpush1.bf16.msra.mxu0 %v1772
        %1776 = vmatprep.subr.bf16.mxu0 0
        %1777 = vmatpush1.bf16.msra.mxu0 0
        %1778 = vmatprep.subr.bf16.mxu0 0
        %1779 = vmatpush1.bf16.msra.mxu0 0
        %1780 = vmatprep.subr.bf16.mxu0 0
        %1781 = vmatpush1.bf16.msra.mxu0 0
        %1782 = vmatprep.subr.bf16.mxu0 0
        %1783 = vmatpush1.bf16.msra.mxu0 0
        %1784 = vmatprep.subr.bf16.mxu0 0
        %1785 = vmatpush1.bf16.msra.mxu0 0
        %1786 = vmatprep.subr.bf16.mxu0 0
        %1787 = vmatpush1.bf16.msra.mxu0 0
        %1788 = vmatprep.subr.bf16.mxu0 0
        %1789 = vmatpush1.bf16.msra.mxu0 0
        %1790 = vmatprep.subr.bf16.mxu0 0
        %1791 = vmatpush1.bf16.msra.mxu0 0
        %1792 = vmatprep.subr.bf16.mxu0 0
        %1793 = vmatpush1.bf16.msra.mxu0 0
        %1794 = vmatprep.subr.bf16.mxu0 0
        %1795 = vmatpush1.bf16.msra.mxu0 0
        %1796 = vmatprep.subr.bf16.mxu0 0
        %1797 = vmatpush1.bf16.msra.mxu0 0
        %1798 = vmatprep.subr.bf16.mxu0 0
        %1799 = vmatpush1.bf16.msra.mxu0 0
        %1800 = vmatprep.subr.bf16.mxu0 0
        %1801 = vmatpush1.bf16.msra.mxu0 0
        %1802 = vmatprep.subr.bf16.mxu0 0
        %1803 = vmatpush1.bf16.msra.mxu0 0
        %1804 = vmatprep.subr.bf16.mxu0 0
        %1805 = vmatpush1.bf16.msra.mxu0 0
        %1806 = vmatprep.mubr.bf16.mxu0 0
        %1807 = vmatmul.mubr.bf16.gmra.mrb[0].mxu0 %v1769
        %v1808 = vpop.f32.mrb[0].mxu0
        %v1809 = vadd.f32 0.0, %v1808
        %v1810 = vpop.f32.mrb[0].mxu0
        %v1811 = vpop.f32.mrb[0].mxu0
        %v1812 = vpop.f32.mrb[0].mxu0
        %1813 = vdwg.mxu0
        %v1815 = vsel %vm1573, %v1674, 0
        %v1818 = vsel %vm1678, %v1203, 0
        %1820 = vmatprep.subr.bf16.mxu0 0
        %1821 = vmatpush1.bf16.msra.mxu0 %v1818
        %1822 = vmatprep.subr.bf16.mxu0 0
        %1823 = vmatpush1.bf16.msra.mxu0 0
        %1824 = vmatprep.subr.bf16.mxu0 0
        %1825 = vmatpush1.bf16.msra.mxu0 0
        %1826 = vmatprep.subr.bf16.mxu0 0
        %1827 = vmatpush1.bf16.msra.mxu0 0
        %1828 = vmatprep.subr.bf16.mxu0 0
        %1829 = vmatpush1.bf16.msra.mxu0 0
        %1830 = vmatprep.subr.bf16.mxu0 0
        %1831 = vmatpush1.bf16.msra.mxu0 0
        %1832 = vmatprep.subr.bf16.mxu0 0
        %1833 = vmatpush1.bf16.msra.mxu0 0
        %1834 = vmatprep.subr.bf16.mxu0 0
        %1835 = vmatpush1.bf16.msra.mxu0 0
        %1836 = vmatprep.subr.bf16.mxu0 0
        %1837 = vmatpush1.bf16.msra.mxu0 0
        %1838 = vmatprep.subr.bf16.mxu0 0
        %1839 = vmatpush1.bf16.msra.mxu0 0
        %1840 = vmatprep.subr.bf16.mxu0 0
        %1841 = vmatpush1.bf16.msra.mxu0 0
        %1842 = vmatprep.subr.bf16.mxu0 0
        %1843 = vmatpush1.bf16.msra.mxu0 0
        %1844 = vmatprep.subr.bf16.mxu0 0
        %1845 = vmatpush1.bf16.msra.mxu0 0
        %1846 = vmatprep.subr.bf16.mxu0 0
        %1847 = vmatpush1.bf16.msra.mxu0 0
        %1848 = vmatprep.subr.bf16.mxu0 0
        %1849 = vmatpush1.bf16.msra.mxu0 0
        %1850 = vmatprep.subr.bf16.mxu0 0
        %1851 = vmatpush1.bf16.msra.mxu0 0
        %1852 = vmatprep.mubr.bf16.mxu0 0
        %1853 = vmatmul.mubr.bf16.gmra.mrb[0].mxu0 %v1815
        %v1854 = vpop.f32.mrb[0].mxu0
        %v1855 = vadd.f32 0.0, %v1854
        %v1856 = vpop.f32.mrb[0].mxu0
        %v1857 = vpop.f32.mrb[0].mxu0
        %v1858 = vpop.f32.mrb[0].mxu0
        %1859 = vdwg.mxu0
        %v1860 = vmul.f32 %v1717, %v1717
        %v1861 = vmul.f32 %v1763, %v1763
        %v1862 = vmul.f32 %v1809, %v1809
        %v1863 = vmul.f32 %v1855, %v1855
        %v1864 = vsel %vm337, %v1860, 0.0
        %1865 = vadd.xlane.f32.xlu0 %v1864
        %v1866 = vpop.xlane.xlu0 %1865
        %v1867 = vsel %vm337, %v1861, 0.0
        %1868 = vadd.xlane.f32.xlu0 %v1867
        %v1869 = vpop.xlane.xlu0 %1868
        %v1870 = vsel %vm337, %v1862, 0.0
        %1871 = vadd.xlane.f32.xlu0 %v1870
        %v1872 = vpop.xlane.xlu0 %1871
        %v1873 = vsel %vm337, %v1863, 0.0
        %1874 = vadd.xlane.f32.xlu0 %v1873
        %v1875 = vpop.xlane.xlu0 %1874
        %v1876 = vrcp.pop 32.0
        %v1877 = vmul.f32 %v1866, %v1876
        %v1878 = vmul.f32 %v1869, %v1876
        %v1879 = vmul.f32 %v1872, %v1876
        %v1880 = vmul.f32 %v1875, %v1876
        %v1881 = vrsqrt.pop %v1877
        %v1882 = vmul.f32 %v1877, %v1881
        %vm1883 = vcmp.eq.f32.partialorder %v1877, inf
        %v1884 = vsel %vm1883, %v1877, %v1882
        %vm1885 = vcmp.eq.f32.partialorder %v1877, 0.0
        %v1886 = vand.u32 %v1877, 2147483648
        %v1887 = vsel %vm1885, %v1886, %v1884
        %v1888 = vrsqrt.pop %v1878
        %v1889 = vmul.f32 %v1878, %v1888
        %vm1890 = vcmp.eq.f32.partialorder %v1878, inf
        %v1891 = vsel %vm1890, %v1878, %v1889
        %vm1892 = vcmp.eq.f32.partialorder %v1878, 0.0
        %v1893 = vand.u32 %v1878, 2147483648
        %v1894 = vsel %vm1892, %v1893, %v1891
        %v1895 = vrsqrt.pop %v1879
        %v1896 = vmul.f32 %v1879, %v1895
        %vm1897 = vcmp.eq.f32.partialorder %v1879, inf
        %v1898 = vsel %vm1897, %v1879, %v1896
        %vm1899 = vcmp.eq.f32.partialorder %v1879, 0.0
        %v1900 = vand.u32 %v1879, 2147483648
        %v1901 = vsel %vm1899, %v1900, %v1898
        %v1902 = vrsqrt.pop %v1880
        %v1903 = vmul.f32 %v1880, %v1902
        %vm1904 = vcmp.eq.f32.partialorder %v1880, inf
        %v1905 = vsel %vm1904, %v1880, %v1903
        %vm1906 = vcmp.eq.f32.partialorder %v1880, 0.0
        %v1907 = vand.u32 %v1880, 2147483648
        %v1908 = vsel %vm1906, %v1907, %v1905
        %v1909 = vadd.f32 %v1887, 1e-08
        %v1910 = vadd.f32 %v1894, 1e-08
        %v1911 = vadd.f32 %v1901, 1e-08
        %v1912 = vadd.f32 %v1908, 1e-08
        %v1913 = vrcp.pop %v1909
        %v1914 = vrcp.pop %v1910
        %v1915 = vrcp.pop %v1911
        %v1916 = vrcp.pop %v1912
        %v1917 = vld [vmem:[%s6] sm:$0x1]
        %v1918 = vmul.f32 %v1917, 0.64449096
        %v1919 = vmul.f32 %v1717, %v1913
        %v1920 = vmul.f32 %v1763, %v1914
        %v1921 = vmul.f32 %v1809, %v1915
        %v1922 = vmul.f32 %v1855, %v1916
        %v1924 = vlaneseq
        %v1925 = vshrl.u32 %v1924, 7
        %v1926 = vsub.s32 0, %v1925
        %v1927 = vrot.slane %v1918, %v1926
        %v1929 = vmul.f32 %v1919, %v1927
        %v1930 = vmul.f32 %v1920, %v1927
        %v1931 = vmul.f32 %v1921, %v1927
        %v1932 = vmul.f32 %v1922, %v1927
        %v1933 = vcombine.low %v1929, %v1931
        %v1934 = vcombine.high %v1929, %v1931
        %v1936 = vunpack.c.l.s4 1983009808
        %v1937 = vunpack.c.0.s8 %v1936
        %v1938 = vlaneseq
        %v1939 = vshrl.u32 %v1938, 7
        %v1940 = vsub.s32 %v1937, %v1939
        %v1941 = vrot.slane %v1933, %v1940
        %v1943 = vunpack.c.l.s4 1983009808
        %v1944 = vunpack.c.0.s8 %v1943
        %v1945 = vlaneseq
        %v1946 = vshrl.u32 %v1945, 7
        %v1947 = vsub.s32 %v1944, %v1946
        %v1948 = vrot.slane %v1934, %v1947
        %v1949 = vcombine.low %v1930, %v1932
        %v1950 = vcombine.high %v1930, %v1932
        %v1952 = vunpack.c.l.s4 1983009808
        %v1953 = vunpack.c.0.s8 %v1952
        %v1954 = vlaneseq
        %v1955 = vshrl.u32 %v1954, 7
        %v1956 = vsub.s32 %v1953, %v1955
        %v1957 = vrot.slane %v1949, %v1956
        %v1959 = vunpack.c.l.s4 1983009808
        %v1960 = vunpack.c.0.s8 %v1959
        %v1961 = vlaneseq
        %v1962 = vshrl.u32 %v1961, 7
        %v1963 = vsub.s32 %v1960, %v1962
        %v1964 = vrot.slane %v1950, %v1963
        %v1965 = vcombine.low %v1941, %v1957
        %v1966 = vcombine.high %v1941, %v1957
        %v1968 = vunpack.c.l.s4 1934713408
        %v1969 = vunpack.c.0.s8 %v1968
        %v1970 = vlaneseq
        %v1971 = vshrl.u32 %v1970, 7
        %v1972 = vsub.s32 %v1969, %v1971
        %v1973 = vrot.slane %v1965, %v1972
        %v1975 = vunpack.c.l.s4 1934713408
        %v1976 = vunpack.c.0.s8 %v1975
        %v1977 = vlaneseq
        %v1978 = vshrl.u32 %v1977, 7
        %v1979 = vsub.s32 %v1976, %v1978
        %v1980 = vrot.slane %v1966, %v1979
        %v1981 = vcombine.low %v1948, %v1964
        %v1982 = vcombine.high %v1948, %v1964
        %v1984 = vunpack.c.l.s4 1934713408
        %v1985 = vunpack.c.0.s8 %v1984
        %v1986 = vlaneseq
        %v1987 = vshrl.u32 %v1986, 7
        %v1988 = vsub.s32 %v1985, %v1987
        %v1989 = vrot.slane %v1981, %v1988
        %v1991 = vunpack.c.l.s4 1934713408
        %v1992 = vunpack.c.0.s8 %v1991
        %v1993 = vlaneseq
        %v1994 = vshrl.u32 %v1993, 7
        %v1995 = vsub.s32 %v1992, %v1994
        %v1996 = vrot.slane %v1982, %v1995
        %v1997 = vcombine.high %v1973, 0.0
        %v1998 = vcombine.high %v1980, 0.0
        %v1999 = vcombine.high %v1989, 0.0
        %v2000 = vcombine.high %v1996, 0.0
        %v2001 = vcombine.low %v1973, %v1980
        %v2003 = vunpack.c.l.s4 1983009808
        %v2004 = vunpack.c.0.s8 %v2003
        %v2005 = vlaneseq
        %v2006 = vshrl.u32 %v2005, 7
        %v2007 = vsub.s32 %v2004, %v2006
        %v2008 = vrot.slane %v2001, %v2007
        %v2009 = vcombine.low %v1997, %v1998
        %v2011 = vunpack.c.l.s4 1983009808
        %v2012 = vunpack.c.0.s8 %v2011
        %v2013 = vlaneseq
        %v2014 = vshrl.u32 %v2013, 7
        %v2015 = vsub.s32 %v2012, %v2014
        %v2016 = vrot.slane %v2009, %v2015
        %v2017 = vcombine.low %v1989, %v1996
        %v2019 = vunpack.c.l.s4 1983009808
        %v2020 = vunpack.c.0.s8 %v2019
        %v2021 = vlaneseq
        %v2022 = vshrl.u32 %v2021, 7
        %v2023 = vsub.s32 %v2020, %v2022
        %v2024 = vrot.slane %v2017, %v2023
        %v2025 = vcombine.low %v1999, %v2000
        %v2027 = vunpack.c.l.s4 1983009808
        %v2028 = vunpack.c.0.s8 %v2027
        %v2029 = vlaneseq
        %v2030 = vshrl.u32 %v2029, 7
        %v2031 = vsub.s32 %v2028, %v2030
        %v2032 = vrot.slane %v2025, %v2031
        %v2033 = vcombine.low %v2008, %v2016
        %v2034 = vcombine.high %v2008, %v2016
        %v2036 = vunpack.c.l.s4 1934713408
        %v2037 = vunpack.c.0.s8 %v2036
        %v2038 = vlaneseq
        %v2039 = vshrl.u32 %v2038, 7
        %v2040 = vsub.s32 %v2037, %v2039
        %v2041 = vrot.slane %v2033, %v2040
        %v2043 = vunpack.c.l.s4 1934713408
        %v2044 = vunpack.c.0.s8 %v2043
        %v2045 = vlaneseq
        %v2046 = vshrl.u32 %v2045, 7
        %v2047 = vsub.s32 %v2044, %v2046
        %v2048 = vrot.slane %v2034, %v2047
        %v2049 = vcombine.low %v2024, %v2032
        %v2050 = vcombine.high %v2024, %v2032
        %v2052 = vunpack.c.l.s4 1934713408
        %v2053 = vunpack.c.0.s8 %v2052
        %v2054 = vlaneseq
        %v2055 = vshrl.u32 %v2054, 7
        %v2056 = vsub.s32 %v2053, %v2055
        %v2057 = vrot.slane %v2049, %v2056
        %v2059 = vunpack.c.l.s4 1934713408
        %v2060 = vunpack.c.0.s8 %v2059
        %v2061 = vlaneseq
        %v2062 = vshrl.u32 %v2061, 7
        %v2063 = vsub.s32 %v2060, %v2062
        %v2064 = vrot.slane %v2050, %v2063
        %v2065 = vcombine.low %v2041, %v2057
        %v2066 = vcombine.high %v2041, %v2057
        %v2067 = vcombine.low %v2048, %v2064
        %v2068 = vcombine.high %v2048, %v2064
        %2070 = vrot.lane.b32.xlu0 %v2066, 32
        %v2071 = vpop.permute.xlu0 %2070
        %2074 = vrot.lane.b32.xlu0 %v2067, 64
        %v2075 = vpop.permute.xlu0 %2074
        %2078 = vrot.lane.b32.xlu0 %v2068, 96
        %v2079 = vpop.permute.xlu0 %2078
        %v2081 = vsel %vm337, %v2065, %v2071
        %vm2082 = vcmask 523264
        %v2083 = vsel %vm2082, %v2081, %v2075
        %vm2084 = vcmask 785408
        %v2085 = vsel %vm2084, %v2083, %v2079
        %v2086 = vpack.c.bf16 %v2085, %v2085
        %v2087 = vld [vmem:[%s5] sm:$0xf]
        %v2088 = vld [vmem:[%s5 + $0x4] sm:$0xf]
        %v2089 = vld [vmem:[%s5 + $0x8] sm:$0xf]
        %v2090 = vld [vmem:[%s5 + $0xc] sm:$0xf]
        %v2091 = vld [vmem:[%s5 + $0x10] sm:$0xf]
        %v2092 = vld [vmem:[%s5 + $0x14] sm:$0xf]
        %v2093 = vld [vmem:[%s5 + $0x18] sm:$0xf]
        %v2094 = vld [vmem:[%s5 + $0x1c] sm:$0xf]
        %v2095 = vld [vmem:[%s5 + $0x20] sm:$0xf]
        %v2096 = vld [vmem:[%s5 + $0x24] sm:$0xf]
        %v2097 = vld [vmem:[%s5 + $0x28] sm:$0xf]
        %v2098 = vld [vmem:[%s5 + $0x2c] sm:$0xf]
        %v2099 = vld [vmem:[%s5 + $0x30] sm:$0xf]
        %v2100 = vld [vmem:[%s5 + $0x34] sm:$0xf]
        %v2101 = vld [vmem:[%s5 + $0x38] sm:$0xf]
        %v2102 = vld [vmem:[%s5 + $0x3c] sm:$0xf]
        %v2119 = vunpack.c.l.b16 %v2087
        %v2120 = vunpack.c.l.b16 %v2088
        %v2121 = vunpack.c.l.b16 %v2089
        %v2122 = vunpack.c.l.b16 %v2090
        %v2123 = vunpack.c.l.b16 %v2091
        %v2124 = vunpack.c.l.b16 %v2092
        %v2125 = vunpack.c.l.b16 %v2093
        %v2126 = vunpack.c.l.b16 %v2094
        %v2127 = vunpack.c.l.b16 %v2095
        %v2128 = vunpack.c.l.b16 %v2096
        %v2129 = vunpack.c.l.b16 %v2097
        %v2130 = vunpack.c.l.b16 %v2098
        %v2131 = vunpack.c.l.b16 %v2099
        %v2132 = vunpack.c.l.b16 %v2100
        %v2133 = vunpack.c.l.b16 %v2101
        %v2134 = vunpack.c.l.b16 %v2102
        %v2135 = vpack.c.b16 %v2120, %v2119
        %v2136 = vpack.c.b16 %v2122, %v2121
        %v2137 = vpack.c.b16 %v2124, %v2123
        %v2138 = vpack.c.b16 %v2126, %v2125
        %v2139 = vpack.c.b16 %v2128, %v2127
        %v2140 = vpack.c.b16 %v2130, %v2129
        %v2141 = vpack.c.b16 %v2132, %v2131
        %v2142 = vpack.c.b16 %v2134, %v2133
        %2151 = vmatprep.subr.bf16.mxu0 0
        %2152 = vmatpush1.bf16.msra.mxu0 %v2135
        %2153 = vmatprep.subr.bf16.mxu0 0
        %2154 = vmatpush1.bf16.msra.mxu0 %v2136
        %2155 = vmatprep.subr.bf16.mxu0 0
        %2156 = vmatpush1.bf16.msra.mxu0 %v2137
        %2157 = vmatprep.subr.bf16.mxu0 0
        %2158 = vmatpush1.bf16.msra.mxu0 %v2138
        %2159 = vmatprep.subr.bf16.mxu0 0
        %2160 = vmatpush1.bf16.msra.mxu0 %v2139
        %2161 = vmatprep.subr.bf16.mxu0 0
        %2162 = vmatpush1.bf16.msra.mxu0 %v2140
        %2163 = vmatprep.subr.bf16.mxu0 0
        %2164 = vmatpush1.bf16.msra.mxu0 %v2141
        %2165 = vmatprep.subr.bf16.mxu0 0
        %2166 = vmatpush1.bf16.msra.mxu0 %v2142
        %2167 = vmatprep.subr.bf16.mxu0 0
        %2168 = vmatpush1.bf16.msra.mxu0 0
        %2169 = vmatprep.subr.bf16.mxu0 0
        %2170 = vmatpush1.bf16.msra.mxu0 0
        %2171 = vmatprep.subr.bf16.mxu0 0
        %2172 = vmatpush1.bf16.msra.mxu0 0
        %2173 = vmatprep.subr.bf16.mxu0 0
        %2174 = vmatpush1.bf16.msra.mxu0 0
        %2175 = vmatprep.subr.bf16.mxu0 0
        %2176 = vmatpush1.bf16.msra.mxu0 0
        %2177 = vmatprep.subr.bf16.mxu0 0
        %2178 = vmatpush1.bf16.msra.mxu0 0
        %2179 = vmatprep.subr.bf16.mxu0 0
        %2180 = vmatpush1.bf16.msra.mxu0 0
        %2181 = vmatprep.subr.bf16.mxu0 0
        %2182 = vmatpush1.bf16.msra.mxu0 0
        %2183 = vmatprep.mubr.bf16.mxu0 0
        %2184 = vmatmul.mubr.bf16.gmra.mrb[0].mxu0 %v2086
        %v2185 = vpop.f32.mrb[0].mxu0
        %v2186 = vadd.f32 0.0, %v2185
        %v2187 = vpop.f32.mrb[0].mxu0
        %v2188 = vpop.f32.mrb[0].mxu0
        %v2189 = vpop.f32.mrb[0].mxu0
        %2190 = vdwg.mxu0
        %2191 = vst.msk [vmem:[%s305] sm:$0xff] %vm337, %v2186
        %s2192 = sand.u32 %s203, 1
        %s2193 = scalar_lea.sflag [#allocation4], %s2192
        %s2194 = sand.u32 %s203, 1
        %s2195 = smul.addr %s2194, 8
        %s2196 = scalar_lea.vmem [#allocation3], %s2195
        // Predicated region
        $region49: #{tpu_custom_call.1} parent=47 // pred_check
          %p2197 = pneg %p213
        $region50: #{tpu_custom_call.1} parent=47 // pred_check_branch
          %2199 = sbr.rel (%p2197) target = $region52
        $region51: #{tpu_custom_call.1} parent=47 // pred_region
          %s2201 = ssub.s32 128, 128
          %2202 = vsyncadd %s2193, %s2201
          %s2203 = sadd.s32 %s27, %s26
          %s2204 = smul.addr %s2203, 128
          %s2205 = scalar_lea.hbm %s7, %s2204
          %s2207 = sshll.u32 %s2196, 4
          %s2208 = int_to_ptr.vmem [resolvable:$true] %s2207
          %2210 = dma.vmem_to_hbm [thread:$0]  %s2208, 128, %s2205, %s2193
        $region52: #{tpu_custom_call.1} parent=47 // pred_fallthru
          _
      $region48: #{tpu_custom_call.1} parent=5 // pred_fallthru
        _
      %p2211 = scmp.le.s32.totalorder 2, %s17
      // Predicated region
      $region53: #{tpu_custom_call.1} parent=5 // pred_check
        %p2212 = pneg %p2211
      $region54: #{tpu_custom_call.1} parent=5 // pred_check_branch
        %2214 = sbr.rel (%p2212) target = $region56
      $region55: #{tpu_custom_call.1} parent=5 // pred_region
        %s2215 = ssub.s32 %s17, 2
        // Predicated region
        $region57: #{tpu_custom_call.1} parent=55 // pred_check
          %p2216 = pneg %p219
        $region58: #{tpu_custom_call.1} parent=55 // pred_check_branch
          %2218 = sbr.rel (%p2216) target = $region60
        $region59: #{tpu_custom_call.1} parent=55 // pred_region
          %s2219 = sand.u32 %s204, 1
          %s2220 = scalar_lea.sflag [#allocation4], %s2219
          %s2221 = sand.u32 %s204, 1
          %s2222 = smul.addr %s2221, 8
          %s2223 = scalar_lea.vmem [#allocation3], %s2222
          %2224 = dma.done %s2220, 128
        $region60: #{tpu_custom_call.1} parent=55 // pred_fallthru
          _
      $region56: #{tpu_custom_call.1} parent=5 // pred_fallthru
        _
    $region6: #{tpu_custom_call.1} parent=1 // loop_footer
      %s21 = sadd.s32 1, %s17
    $region7: #{tpu_custom_call.1} parent=1 // loop_footer_branch
      %16 = sbr.rel target = $region3
    $region8: #{tpu_custom_call.1} parent=1 // loop_exit
      _
    %2225 = vsyncpa [#allocation4], 1
    %s2226 = scalar_lea.sflag [#allocation4], 1
    %2227 = vsyncpa %s2226, 1

</llo_original>
